<compile_context>
chip_gen: v6e
topology: v6e:2x2x1
jax: 0.10.0
libtpu: 0.0.40
codegen_flags: <defaults>
</compile_context>

<pallas_src>
import functools

import jax
import jax.numpy as jnp
from jax.experimental import pallas as pl
from jax.experimental.pallas import tpu as pltpu


def _round_up(n: int, m: int) -> int:
    return ((n + m - 1) // m) * m


def _default_vmem_limit_bytes() -> int:
    # ~3/4 of physical VMEM, capped at 96 MiB: 96 MiB on v5e/v6e (128 MiB),
    # 48 MiB on v7x (64 MiB).  Falls back to a conservative 48 MiB if the
    # hardware query fails.
    try:
        cap = pltpu.get_tpu_info().vmem_capacity_bytes
    except Exception:
        cap = 64 * 1024 * 1024
    return int(min(cap * 3 // 4, 96 * 1024 * 1024))


def _pick_batch_tile(batch: int, block_b: int) -> int:
    """Batch tile: >= block_b rows for long batches, but split into at least
    two grid steps when possible (so v7x's two TensorCores both get work),
    rounded to 16 rows for bf16 sublane packing."""
    if batch >= 2 * block_b:
        return block_b
    tb = max(16, _round_up(-(-batch // 2), 16))
    return min(tb, _round_up(batch, 16))


def _embed_kernel(x_ref, w1_ref, b1_ref, w2_ref, b2_ref, o_ref):
    # x : [TB, D_in]  f32 (cast to bf16 here — no wrapper-side copy)
    # w1: [D_in, H]   bf16      b1: [1, H]     f32
    # w2: [H, D_out]  bf16      b2: [1, D_out] f32
    # o : [TB, D_out] o_ref.dtype
    x = x_ref[...].astype(jnp.bfloat16)

    # Linear 1 (MXU, bf16 in / f32 acc) + bias + GELU, kept in registers.
    h = jnp.dot(x, w1_ref[...], preferred_element_type=jnp.float32)
    h = jax.nn.gelu(h + b1_ref[...])

    # Linear 2: feed the bf16-cast activation straight into the MXU
    # (no f32 VMEM round-trip for the hidden activation).
    y = jnp.dot(h.astype(jnp.bfloat16), w2_ref[...],
                preferred_element_type=jnp.float32)
    y = y + b2_ref[...]

    # Row-wise L2 normalization (no lane padding, so the reduction is exact).
    inv = jax.lax.rsqrt(jnp.sum(y * y, axis=-1, keepdims=True) + 1e-12)
    o_ref[...] = (y * inv).astype(o_ref.dtype)


@functools.partial(
    jax.jit,
    static_argnames=("block_b", "single_buffer_weights", "out_dtype"))
def _forward(x, w1, b1, w2, b2, *, block_b, single_buffer_weights, out_dtype):
    batch, d_in = x.shape
    hidden = w1.shape[1]
    d_out = w2.shape[1]

    tb = _pick_batch_tile(batch, block_b)
    grid = (pl.cdiv(batch, tb),)

    # Weights / biases: constant block index -> fetched once, VMEM-resident.
    if single_buffer_weights:
        def resident(shape):
            return pl.BlockSpec(shape, lambda i: (0, 0),
                                pipeline_mode=pl.Buffered(1))
    else:
        def resident(shape):
            return pl.BlockSpec(shape, lambda i: (0, 0))

    cost = pl.CostEstimate(
        flops=2 * batch * (d_in * hidden + hidden * d_out),
        transcendentals=batch * hidden,           # GELU
        bytes_accessed=(x.size * x.dtype.itemsize
                        + (w1.size + w2.size) * 2
                        + (b1.size + b2.size) * 4
                        + batch * d_out * jnp.dtype(out_dtype).itemsize),
    )

    return pl.pallas_call(
        _embed_kernel,
        out_shape=jax.ShapeDtypeStruct((batch, d_out), out_dtype),
        grid_spec=pltpu.PrefetchScalarGridSpec(
            num_scalar_prefetch=0,
            grid=grid,
            in_specs=[
                # x tile streams per grid step (auto double-buffered).
                pl.BlockSpec((tb, d_in), lambda i: (i, 0)),
                resident((d_in, hidden)),
                resident((1, hidden)),
                resident((hidden, d_out)),
                resident((1, d_out)),
            ],
            out_specs=pl.BlockSpec((tb, d_out), lambda i: (i, 0)),
        ),
        compiler_params=pltpu.CompilerParams(
            dimension_semantics=("parallel",),     # shard batch tiles over TCs
            vmem_limit_bytes=_default_vmem_limit_bytes(),
        ),
        cost_estimate=cost,
    )(x, w1, b1, w2, b2)


def prepare_params(w1, b1, w2, b2):
    """One-time weight prep (hoisted out of the per-call forward): MXU
    operands in bf16, biases kept f32 for the f32 elementwise path."""
    return (w1.astype(jnp.bfloat16),
            jnp.asarray(b1, jnp.float32).reshape(1, -1),
            w2.astype(jnp.bfloat16),
            jnp.asarray(b2, jnp.float32).reshape(1, -1))


def onnx_export_wrapper_forward(x, params, *, block_b=512,
                                out_dtype=jnp.float32):
    """Equivalent of ONNXExportWrapper(model)(x) for the synthetic inner
    model, with params pre-prepared by prepare_params()."""
    w1, b1, w2, b2 = params
    try:
        return _forward(x, w1, b1, w2, b2, block_b=block_b,
                        single_buffer_weights=True, out_dtype=out_dtype)
    except Exception:
        # pipeline_mode=pl.Buffered(1) unsupported on this jax/libtpu combo:
        # fall back to default (double-buffered, but still resident) weights.
        return _forward(x, w1, b1, w2, b2, block_b=block_b,
                        single_buffer_weights=False, out_dtype=out_dtype)


def _reference(x, w1, b1, w2, b2):
    h = jax.nn.gelu(x @ w1 + b1)
    y = h @ w2 + b2
    return y / jnp.sqrt(jnp.sum(y * y, axis=-1, keepdims=True) + 1e-12)


if __name__ == "__main__":
    key = jax.random.PRNGKey(0)
    k_x, k_w1, k_b1, k_w2, k_b2 = jax.random.split(key, 5)

    # Small shapes; B deliberately not a multiple of 16 so both the partial
    # final batch block and the >=2-step grid split are exercised.
    B, D_IN, H, D_OUT = 40, 32, 64, 32
    x = jax.random.normal(k_x, (B, D_IN), dtype=jnp.float32)
    w1 = jax.random.normal(k_w1, (D_IN, H), dtype=jnp.float32) * 0.1
    b1 = jax.random.normal(k_b1, (1, H), dtype=jnp.float32) * 0.1
    w2 = jax.random.normal(k_w2, (H, D_OUT), dtype=jnp.float32) * 0.1
    b2 = jax.random.normal(k_b2, (1, D_OUT), dtype=jnp.float32) * 0.1

    params = prepare_params(w1, b1, w2, b2)
    out = onnx_export_wrapper_forward(x, params)
    out = jax.block_until_ready(out)

    ref = _reference(x, w1, b1, w2, b2)
    assert out.shape == (B, D_OUT), out.shape
    # bf16 MXU operands vs f32 reference -> loosened tolerance.
    assert jnp.allclose(out, ref, atol=2e-2, rtol=2e-2), "mismatch vs reference"

    print("KERNEL_OK")
</pallas_src>

<mosaic_0001>
module attributes {stable_mosaic.version = 11 : i64} {
  func.func @_embed_kernel(%arg0: i32, %arg1: memref<32x32xf32, #tpu.memory_space<vmem>>, %arg2: memref<32x64xbf16, #tpu.memory_space<vmem>>, %arg3: memref<1x64xf32, #tpu.memory_space<vmem>>, %arg4: memref<64x32xbf16, #tpu.memory_space<vmem>>, %arg5: memref<1x32xf32, #tpu.memory_space<vmem>>, %arg6: memref<32x32xf32, #tpu.memory_space<vmem>>) attributes {dimension_semantics = [#tpu.dimension_semantics<parallel>], iteration_bounds = array<i64: 2>, scalar_prefetch = 0 : i64, scratch_operands = 0 : i64, tpu.core_type = #tpu.core_type<tc>, window_params = [{transform_indices = @transform_0, window_bounds = array<i64: 32, 32>}, {pipeline_mode = #tpu.pipeline_mode<synchronous>, transform_indices = @transform_1, window_bounds = array<i64: 32, 64>}, {pipeline_mode = #tpu.pipeline_mode<synchronous>, transform_indices = @transform_2, window_bounds = array<i64: 1, 64>}, {pipeline_mode = #tpu.pipeline_mode<synchronous>, transform_indices = @transform_3, window_bounds = array<i64: 64, 32>}, {pipeline_mode = #tpu.pipeline_mode<synchronous>, transform_indices = @transform_4, window_bounds = array<i64: 1, 32>}, {transform_indices = @transform_5, window_bounds = array<i64: 32, 32>}]} {
    %c0 = arith.constant 0 : index
    %c0_0 = arith.constant 0 : index
    %0 = vector.load %arg1[%c0, %c0_0] : memref<32x32xf32, #tpu.memory_space<vmem>>, vector<32x32xf32>
    %1 = arith.truncf %0 : vector<32x32xf32> to vector<32x32xbf16>
    %c0_1 = arith.constant 0 : index
    %c0_2 = arith.constant 0 : index
    %2 = vector.load %arg2[%c0_1, %c0_2] : memref<32x64xbf16, #tpu.memory_space<vmem>>, vector<32x64xbf16>
    %cst = arith.constant dense<0.000000e+00> : vector<32x64xf32>
    %3 = tpu.matmul %1, %2, %cst {dimension_numbers = #tpu.dot_dimension_numbers<[1], [0], [0], [1], [0, 0, 1, 1], [], []>} : vector<32x32xbf16>, vector<32x64xbf16>, vector<32x64xf32> -> vector<32x64xf32>
    %c0_3 = arith.constant 0 : index
    %c0_4 = arith.constant 0 : index
    %4 = vector.load %arg3[%c0_3, %c0_4] : memref<1x64xf32, #tpu.memory_space<vmem>>, vector<1x64xf32>
    %5 = vector.broadcast %4 : vector<1x64xf32> to vector<32x64xf32>
    %6 = arith.addf %3, %5 : vector<32x64xf32>
    %7 = arith.mulf %6, %6 : vector<32x64xf32>
    %8 = arith.mulf %6, %7 : vector<32x64xf32>
    %cst_5 = arith.constant 4.471500e-02 : f32
    %9 = vector.broadcast %cst_5 : f32 to vector<32x64xf32>
    %10 = arith.mulf %9, %8 : vector<32x64xf32>
    %11 = arith.addf %6, %10 : vector<32x64xf32>
    %cst_6 = arith.constant 0.797884583 : f32
    %12 = vector.broadcast %cst_6 : f32 to vector<32x64xf32>
    %13 = arith.mulf %12, %11 : vector<32x64xf32>
    %14 = math.tanh %13 : vector<32x64xf32>
    %cst_7 = arith.constant 1.000000e+00 : f32
    %15 = vector.broadcast %cst_7 : f32 to vector<32x64xf32>
    %16 = arith.addf %15, %14 : vector<32x64xf32>
    %cst_8 = arith.constant 5.000000e-01 : f32
    %17 = vector.broadcast %cst_8 : f32 to vector<32x64xf32>
    %18 = arith.mulf %17, %16 : vector<32x64xf32>
    %19 = arith.mulf %6, %18 : vector<32x64xf32>
    %20 = arith.truncf %19 : vector<32x64xf32> to vector<32x64xbf16>
    %c0_9 = arith.constant 0 : index
    %c0_10 = arith.constant 0 : index
    %21 = vector.load %arg4[%c0_9, %c0_10] : memref<64x32xbf16, #tpu.memory_space<vmem>>, vector<64x32xbf16>
    %cst_11 = arith.constant dense<0.000000e+00> : vector<32x32xf32>
    %22 = tpu.matmul %20, %21, %cst_11 {dimension_numbers = #tpu.dot_dimension_numbers<[1], [0], [0], [1], [0, 0, 1, 1], [], []>} : vector<32x64xbf16>, vector<64x32xbf16>, vector<32x32xf32> -> vector<32x32xf32>
    %c0_12 = arith.constant 0 : index
    %c0_13 = arith.constant 0 : index
    %23 = vector.load %arg5[%c0_12, %c0_13] : memref<1x32xf32, #tpu.memory_space<vmem>>, vector<1x32xf32>
    %24 = vector.broadcast %23 : vector<1x32xf32> to vector<32x32xf32>
    %25 = arith.addf %22, %24 : vector<32x32xf32>
    %26 = arith.mulf %25, %25 : vector<32x32xf32>
    %cst_14 = arith.constant dense<0.000000e+00> : vector<32xf32>
    %27 = vector.multi_reduction <add>, %26, %cst_14 [1] : vector<32x32xf32> to vector<32xf32>
    %28 = vector.shape_cast %27 : vector<32xf32> to vector<32x1xf32>
    %cst_15 = arith.constant 9.99999996E-13 : f32
    %29 = vector.broadcast %cst_15 : f32 to vector<32x1xf32>
    %30 = arith.addf %28, %29 : vector<32x1xf32>
    %31 = math.rsqrt %30 : vector<32x1xf32>
    %32 = vector.broadcast %31 : vector<32x1xf32> to vector<32x32xf32>
    %33 = arith.mulf %25, %32 : vector<32x32xf32>
    %c0_16 = arith.constant 0 : index
    %c0_17 = arith.constant 0 : index
    %34 = vector.load %arg6[%c0_16, %c0_17] : memref<32x32xf32, #tpu.memory_space<vmem>>, vector<32x32xf32>
    tpu.vector_store %arg6[%c0_16, %c0_17], %33 {strides = array<i32>} : memref<32x32xf32, #tpu.memory_space<vmem>>, vector<32x32xf32>,
    return
  }
  func.func @transform_0(%arg0: i32) -> (i32, i32) {
    %c0_i32 = arith.constant 0 : i32
    %c0_i32_0 = arith.constant 0 : i32
    return %arg0, %c0_i32 : i32, i32
  }
  func.func @transform_1(%arg0: i32) -> (i32, i32) {
    %c0_i32 = arith.constant 0 : i32
    %c0_i32_0 = arith.constant 0 : i32
    %c0_i32_1 = arith.constant 0 : i32
    return %c0_i32, %c0_i32_0 : i32, i32
  }
  func.func @transform_2(%arg0: i32) -> (i32, i32) {
    %c0_i32 = arith.constant 0 : i32
    %c0_i32_0 = arith.constant 0 : i32
    %c0_i32_1 = arith.constant 0 : i32
    return %c0_i32, %c0_i32_0 : i32, i32
  }
  func.func @transform_3(%arg0: i32) -> (i32, i32) {
    %c0_i32 = arith.constant 0 : i32
    %c0_i32_0 = arith.constant 0 : i32
    %c0_i32_1 = arith.constant 0 : i32
    return %c0_i32, %c0_i32_0 : i32, i32
  }
  func.func @transform_4(%arg0: i32) -> (i32, i32) {
    %c0_i32 = arith.constant 0 : i32
    %c0_i32_0 = arith.constant 0 : i32
    %c0_i32_1 = arith.constant 0 : i32
    return %c0_i32, %c0_i32_0 : i32, i32
  }
  func.func @transform_5(%arg0: i32) -> (i32, i32) {
    %c0_i32 = arith.constant 0 : i32
    %c0_i32_0 = arith.constant 0 : i32
    return %arg0, %c0_i32 : i32, i32
  }
}

module attributes {stable_mosaic.version = 11 : i64} {
  func.func @_embed_kernel(%arg0: i32, %arg1: memref<32x32xf32, #tpu.memory_space<vmem>>, %arg2: memref<32x64xbf16, #tpu.memory_space<vmem>>, %arg3: memref<1x64xf32, #tpu.memory_space<vmem>>, %arg4: memref<64x32xbf16, #tpu.memory_space<vmem>>, %arg5: memref<1x32xf32, #tpu.memory_space<vmem>>, %arg6: memref<32x32xf32, #tpu.memory_space<vmem>>) attributes {dimension_semantics = [#tpu.dimension_semantics<parallel>], iteration_bounds = array<i64: 2>, scalar_prefetch = 0 : i64, scratch_operands = 0 : i64, tpu.core_type = #tpu.core_type<tc>, window_params = [{transform_indices = @transform_0, window_bounds = array<i64: 32, 32>}, {pipeline_mode = #tpu.pipeline_mode<synchronous>, transform_indices = @transform_1, window_bounds = array<i64: 32, 64>}, {pipeline_mode = #tpu.pipeline_mode<synchronous>, transform_indices = @transform_2, window_bounds = array<i64: 1, 64>}, {pipeline_mode = #tpu.pipeline_mode<synchronous>, transform_indices = @transform_3, window_bounds = array<i64: 64, 32>}, {pipeline_mode = #tpu.pipeline_mode<synchronous>, transform_indices = @transform_4, window_bounds = array<i64: 1, 32>}, {transform_indices = @transform_5, window_bounds = array<i64: 32, 32>}]} {
    %c0 = arith.constant 0 : index
    %c0_0 = arith.constant 0 : index
    %0 = vector.load %arg1[%c0, %c0_0] : memref<32x32xf32, #tpu.memory_space<vmem>>, vector<32x32xf32>
    %1 = arith.truncf %0 : vector<32x32xf32> to vector<32x32xbf16>
    %c0_1 = arith.constant 0 : index
    %c0_2 = arith.constant 0 : index
    %2 = vector.load %arg2[%c0_1, %c0_2] : memref<32x64xbf16, #tpu.memory_space<vmem>>, vector<32x64xbf16>
    %cst = arith.constant dense<0.000000e+00> : vector<32x64xf32>
    %3 = tpu.matmul %1, %2, %cst {dimension_numbers = #tpu.dot_dimension_numbers<[1], [0], [0], [1], [0, 0, 1, 1], [], []>} : vector<32x32xbf16>, vector<32x64xbf16>, vector<32x64xf32> -> vector<32x64xf32>
    %c0_3 = arith.constant 0 : index
    %c0_4 = arith.constant 0 : index
    %4 = vector.load %arg3[%c0_3, %c0_4] : memref<1x64xf32, #tpu.memory_space<vmem>>, vector<1x64xf32>
    %5 = vector.broadcast %4 : vector<1x64xf32> to vector<32x64xf32>
    %6 = arith.addf %3, %5 : vector<32x64xf32>
    %7 = arith.mulf %6, %6 : vector<32x64xf32>
    %8 = arith.mulf %6, %7 : vector<32x64xf32>
    %cst_5 = arith.constant 4.471500e-02 : f32
    %9 = vector.broadcast %cst_5 : f32 to vector<32x64xf32>
    %10 = arith.mulf %9, %8 : vector<32x64xf32>
    %11 = arith.addf %6, %10 : vector<32x64xf32>
    %cst_6 = arith.constant 0.797884583 : f32
    %12 = vector.broadcast %cst_6 : f32 to vector<32x64xf32>
    %13 = arith.mulf %12, %11 : vector<32x64xf32>
    %14 = math.tanh %13 : vector<32x64xf32>
    %cst_7 = arith.constant 1.000000e+00 : f32
    %15 = vector.broadcast %cst_7 : f32 to vector<32x64xf32>
    %16 = arith.addf %15, %14 : vector<32x64xf32>
    %cst_8 = arith.constant 5.000000e-01 : f32
    %17 = vector.broadcast %cst_8 : f32 to vector<32x64xf32>
    %18 = arith.mulf %17, %16 : vector<32x64xf32>
    %19 = arith.mulf %6, %18 : vector<32x64xf32>
    %20 = arith.truncf %19 : vector<32x64xf32> to vector<32x64xbf16>
    %c0_9 = arith.constant 0 : index
    %c0_10 = arith.constant 0 : index
    %21 = vector.load %arg4[%c0_9, %c0_10] : memref<64x32xbf16, #tpu.memory_space<vmem>>, vector<64x32xbf16>
    %cst_11 = arith.constant dense<0.000000e+00> : vector<32x32xf32>
    %22 = tpu.matmul %20, %21, %cst_11 {dimension_numbers = #tpu.dot_dimension_numbers<[1], [0], [0], [1], [0, 0, 1, 1], [], []>} : vector<32x64xbf16>, vector<64x32xbf16>, vector<32x32xf32> -> vector<32x32xf32>
    %c0_12 = arith.constant 0 : index
    %c0_13 = arith.constant 0 : index
    %23 = vector.load %arg5[%c0_12, %c0_13] : memref<1x32xf32, #tpu.memory_space<vmem>>, vector<1x32xf32>
    %24 = vector.broadcast %23 : vector<1x32xf32> to vector<32x32xf32>
    %25 = arith.addf %22, %24 : vector<32x32xf32>
    %26 = arith.mulf %25, %25 : vector<32x32xf32>
    %cst_14 = arith.constant dense<0.000000e+00> : vector<32xf32>
    %27 = vector.multi_reduction <add>, %26, %cst_14 [1] : vector<32x32xf32> to vector<32xf32>
    %28 = vector.shape_cast %27 : vector<32xf32> to vector<32x1xf32>
    %cst_15 = arith.constant 9.99999996E-13 : f32
    %29 = vector.broadcast %cst_15 : f32 to vector<32x1xf32>
    %30 = arith.addf %28, %29 : vector<32x1xf32>
    %31 = math.rsqrt %30 : vector<32x1xf32>
    %32 = vector.broadcast %31 : vector<32x1xf32> to vector<32x32xf32>
    %33 = arith.mulf %25, %32 : vector<32x32xf32>
    %c0_16 = arith.constant 0 : index
    %c0_17 = arith.constant 0 : index
    %34 = vector.load %arg6[%c0_16, %c0_17] : memref<32x32xf32, #tpu.memory_space<vmem>>, vector<32x32xf32>
    tpu.vector_store %arg6[%c0_16, %c0_17], %33 {strides = array<i32>} : memref<32x32xf32, #tpu.memory_space<vmem>>, vector<32x32xf32>,
    return
  }
  func.func @transform_0(%arg0: i32) -> (i32, i32) {
    %c0_i32 = arith.constant 0 : i32
    %c0_i32_0 = arith.constant 0 : i32
    return %arg0, %c0_i32 : i32, i32
  }
  func.func @transform_1(%arg0: i32) -> (i32, i32) {
    %c0_i32 = arith.constant 0 : i32
    %c0_i32_0 = arith.constant 0 : i32
    %c0_i32_1 = arith.constant 0 : i32
    return %c0_i32, %c0_i32_0 : i32, i32
  }
  func.func @transform_2(%arg0: i32) -> (i32, i32) {
    %c0_i32 = arith.constant 0 : i32
    %c0_i32_0 = arith.constant 0 : i32
    %c0_i32_1 = arith.constant 0 : i32
    return %c0_i32, %c0_i32_0 : i32, i32
  }
  func.func @transform_3(%arg0: i32) -> (i32, i32) {
    %c0_i32 = arith.constant 0 : i32
    %c0_i32_0 = arith.constant 0 : i32
    %c0_i32_1 = arith.constant 0 : i32
    return %c0_i32, %c0_i32_0 : i32, i32
  }
  func.func @transform_4(%arg0: i32) -> (i32, i32) {
    %c0_i32 = arith.constant 0 : i32
    %c0_i32_0 = arith.constant 0 : i32
    %c0_i32_1 = arith.constant 0 : i32
    return %c0_i32, %c0_i32_0 : i32, i32
  }
  func.func @transform_5(%arg0: i32) -> (i32, i32) {
    %c0_i32 = arith.constant 0 : i32
    %c0_i32_0 = arith.constant 0 : i32
    return %arg0, %c0_i32 : i32, i32
  }
}

</mosaic_0001>

<llo_original>
// kernel: _forward.1
$region0: #{_forward.1}
  #allocation0 [shape = 'u32[]', space=smem, size = 0x4, offset = 0x4, fixed_abs, tag = 'smem constant byte address 0x4 - core index']
  #allocation1 [shape = 'u32[144,128]{1,0:T(1,128)}', space=vmem, size = 0x12000, scoped, tag = 'internal scratch']
  %s0 = inlined_call_operand.vmem [shape: f32[40,32], index: 0, kind: input, shape index: {}]
  %s1 = inlined_call_operand.vmem [shape: bf16[32,64], index: 1, kind: input, shape index: {}]
  %s2 = inlined_call_operand.vmem [shape: f32[1,64], index: 2, kind: input, shape index: {}]
  %s3 = inlined_call_operand.vmem [shape: bf16[64,32], index: 3, kind: input, shape index: {}]
  %s4 = inlined_call_operand.vmem [shape: f32[1,32], index: 4, kind: input, shape index: {}]
  %s5 = inlined_call_operand.vmem [shape: f32[40,32], index: 5, kind: output, shape index: {}]
  %s6 = sld [smem:[#allocation0]]
  $region101: #{_forward.1} parent=0
    _
  %s8 = ssub.s32 1, %s6
  %s9 = scalar_select 0, %s8, %s6
  $region1: #{_forward.1} parent=0
    #allocation2 [shape = 'u8[32768]{0}', space=vmem, size = 0x8000, scoped, tag = 'output window, operand 0']
    loop: start=0, step=1, limit=4
    $region2: #{_forward.1} parent=1 // loop_pre_header
      _
    $region3: #{_forward.1} parent=1 // loop_header
      %s11 = sphi 0, %s15
      %p12 = scmp.ge.s32.totalorder %s11, 4
      %s21 = sphi 0, %s23
      %s24 = sphi 0, %s21
      %s25 = sphi 0, %s24
      %s41 = sphi 0, %s25
      %s45 = sphi 0, %s45
      %s47 = sphi 0, %s45
      %s48 = sphi 0, %s47
      %s62 = sphi 0, %s48
      %s66 = sphi 0, %s66
      %s68 = sphi 0, %s66
      %s69 = sphi 0, %s68
      %s83 = sphi 0, %s69
      %s87 = sphi 0, %s87
      %s89 = sphi 0, %s87
      %s90 = sphi 0, %s89
      %s104 = sphi 0, %s90
      %s108 = sphi 0, %s108
      %s110 = sphi 0, %s108
      %s111 = sphi 0, %s110
      %s125 = sphi 0, %s111
      %s131 = sphi 0, %s133
      %s134 = sphi 0, %s131
      %s135 = sphi 0, %s134
      %s151 = sphi 0, %s135
    $region4: #{_forward.1} parent=1 // loop_header_branch
      %14 = sbr.rel (%p12) target = $region8
    $region5: #{_forward.1} parent=1 // loop_body
      %s16 = ssub.s32 %s11, 1
      %s17 = ssub.s32 %s11, 2
      %s18 = sadd.s32 %s11, 1
      %s19 = ssub.s32 %s11, %s18
      %p20 = scmp.eq.s32.totalorder %s19, 0
      %s22 = sadd.s32 %s21, 1
      %s23 = scalar_select %p20, %s21, %s22
      %p26 = pneg %p20
      %p27 = scmp.eq.s32.totalorder %s11, 1
      %p28 = por %p26, %p27
      %p29 = scmp.ne.s32.totalorder %s21, %s24
      %p30 = scmp.eq.s32.totalorder %s11, 0
      %p31 = por %p29, %p30
      %p32 = scmp.ne.s32.totalorder %s21, %s24
      %p33 = scmp.eq.s32.totalorder %s16, 1
      %p34 = por %p32, %p33
      %p35 = scmp.ne.s32.totalorder %s24, %s25
      %p36 = scmp.eq.s32.totalorder %s16, 0
      %p37 = por %p35, %p36
      %p38 = scmp.ne.s32.totalorder %s24, %s25
      %p39 = scmp.eq.s32.totalorder %s17, 1
      %p40 = por %p38, %p39
      %p42 = scmp.ne.s32.totalorder %s25, %s41
      %p43 = scmp.eq.s32.totalorder %s17, 0
      %p44 = por %p42, %p43
      %s46 = sadd.s32 %s45, 1
      %p49 = scmp.eq.s32.totalorder %s11, 1
      %p50 = scmp.ne.s32.totalorder %s45, %s47
      %p51 = scmp.eq.s32.totalorder %s11, 0
      %p52 = por %p50, %p51
      %p53 = scmp.ne.s32.totalorder %s45, %s47
      %p54 = scmp.eq.s32.totalorder %s16, 1
      %p55 = por %p53, %p54
      %p56 = scmp.ne.s32.totalorder %s47, %s48
      %p57 = scmp.eq.s32.totalorder %s16, 0
      %p58 = por %p56, %p57
      %p59 = scmp.ne.s32.totalorder %s47, %s48
      %p60 = scmp.eq.s32.totalorder %s17, 1
      %p61 = por %p59, %p60
      %p63 = scmp.ne.s32.totalorder %s48, %s62
      %p64 = scmp.eq.s32.totalorder %s17, 0
      %p65 = por %p63, %p64
      %s67 = sadd.s32 %s66, 1
      %p70 = scmp.eq.s32.totalorder %s11, 1
      %p71 = scmp.ne.s32.totalorder %s66, %s68
      %p72 = scmp.eq.s32.totalorder %s11, 0
      %p73 = por %p71, %p72
      %p74 = scmp.ne.s32.totalorder %s66, %s68
      %p75 = scmp.eq.s32.totalorder %s16, 1
      %p76 = por %p74, %p75
      %p77 = scmp.ne.s32.totalorder %s68, %s69
      %p78 = scmp.eq.s32.totalorder %s16, 0
      %p79 = por %p77, %p78
      %p80 = scmp.ne.s32.totalorder %s68, %s69
      %p81 = scmp.eq.s32.totalorder %s17, 1
      %p82 = por %p80, %p81
      %p84 = scmp.ne.s32.totalorder %s69, %s83
      %p85 = scmp.eq.s32.totalorder %s17, 0
      %p86 = por %p84, %p85
      %s88 = sadd.s32 %s87, 1
      %p91 = scmp.eq.s32.totalorder %s11, 1
      %p92 = scmp.ne.s32.totalorder %s87, %s89
      %p93 = scmp.eq.s32.totalorder %s11, 0
      %p94 = por %p92, %p93
      %p95 = scmp.ne.s32.totalorder %s87, %s89
      %p96 = scmp.eq.s32.totalorder %s16, 1
      %p97 = por %p95, %p96
      %p98 = scmp.ne.s32.totalorder %s89, %s90
      %p99 = scmp.eq.s32.totalorder %s16, 0
      %p100 = por %p98, %p99
      %p101 = scmp.ne.s32.totalorder %s89, %s90
      %p102 = scmp.eq.s32.totalorder %s17, 1
      %p103 = por %p101, %p102
      %p105 = scmp.ne.s32.totalorder %s90, %s104
      %p106 = scmp.eq.s32.totalorder %s17, 0
      %p107 = por %p105, %p106
      %s109 = sadd.s32 %s108, 1
      %p112 = scmp.eq.s32.totalorder %s11, 1
      %p113 = scmp.ne.s32.totalorder %s108, %s110
      %p114 = scmp.eq.s32.totalorder %s11, 0
      %p115 = por %p113, %p114
      %p116 = scmp.ne.s32.totalorder %s108, %s110
      %p117 = scmp.eq.s32.totalorder %s16, 1
      %p118 = por %p116, %p117
      %p119 = scmp.ne.s32.totalorder %s110, %s111
      %p120 = scmp.eq.s32.totalorder %s16, 0
      %p121 = por %p119, %p120
      %p122 = scmp.ne.s32.totalorder %s110, %s111
      %p123 = scmp.eq.s32.totalorder %s17, 1
      %p124 = por %p122, %p123
      %p126 = scmp.ne.s32.totalorder %s111, %s125
      %p127 = scmp.eq.s32.totalorder %s17, 0
      %p128 = por %p126, %p127
      %s129 = ssub.s32 %s11, %s18
      %p130 = scmp.eq.s32.totalorder %s129, 0
      %s132 = sadd.s32 %s131, 1
      %s133 = scalar_select %p130, %s131, %s132
      %p136 = pneg %p130
      %p137 = scmp.eq.s32.totalorder %s11, 1
      %p138 = por %p136, %p137
      %p139 = scmp.ne.s32.totalorder %s131, %s134
      %p140 = scmp.eq.s32.totalorder %s11, 0
      %p141 = por %p139, %p140
      %p142 = scmp.ne.s32.totalorder %s131, %s134
      %p143 = scmp.eq.s32.totalorder %s16, 1
      %p144 = por %p142, %p143
      %p145 = scmp.ne.s32.totalorder %s134, %s135
      %p146 = scmp.eq.s32.totalorder %s16, 0
      %p147 = por %p145, %p146
      %p148 = scmp.ne.s32.totalorder %s134, %s135
      %p149 = scmp.eq.s32.totalorder %s17, 1
      %p150 = por %p148, %p149
      %p152 = scmp.ne.s32.totalorder %s135, %s151
      %p153 = scmp.eq.s32.totalorder %s17, 0
      %p154 = por %p152, %p153
      %p155 = scmp.le.s32.totalorder 1, %s11
      %p156 = scmp.lt.s32.totalorder %s11, 3
      %p157 = pnand %p155, %p156
      %p158 = pneg %p157
      // Predicated region
      $region9: #{_forward.1} parent=5 // pred_check
        _
      $region10: #{_forward.1} parent=5 // pred_check_branch
        %160 = sbr.rel (%p157) target = $region12
      $region11: #{_forward.1} parent=5 // pred_region
        %s161 = ssub.s32 %s11, 1
        // Predicated region
        $region13: #{_forward.1} parent=11 // pred_check
          %p162 = pneg %p58
        $region14: #{_forward.1} parent=11 // pred_check_branch
          %164 = sbr.rel (%p162) target = $region16
        $region15: #{_forward.1} parent=11 // pred_region
          _
        $region16: #{_forward.1} parent=11 // pred_fallthru
          _
        // Predicated region
        $region17: #{_forward.1} parent=11 // pred_check
          %p165 = pneg %p79
        $region18: #{_forward.1} parent=11 // pred_check_branch
          %167 = sbr.rel (%p165) target = $region20
        $region19: #{_forward.1} parent=11 // pred_region
          _
        $region20: #{_forward.1} parent=11 // pred_fallthru
          _
        // Predicated region
        $region21: #{_forward.1} parent=11 // pred_check
          %p168 = pneg %p100
        $region22: #{_forward.1} parent=11 // pred_check_branch
          %170 = sbr.rel (%p168) target = $region24
        $region23: #{_forward.1} parent=11 // pred_region
          _
        $region24: #{_forward.1} parent=11 // pred_fallthru
          _
        // Predicated region
        $region25: #{_forward.1} parent=11 // pred_check
          %p171 = pneg %p121
        $region26: #{_forward.1} parent=11 // pred_check_branch
          %173 = sbr.rel (%p171) target = $region28
        $region27: #{_forward.1} parent=11 // pred_region
          _
        $region28: #{_forward.1} parent=11 // pred_fallthru
          _
      $region12: #{_forward.1} parent=5 // pred_fallthru
        _
      %p174 = scmp.lt.s32.totalorder %s11, 2
      // Predicated region
      $region29: #{_forward.1} parent=5 // pred_check
        %p175 = pneg %p174
      $region30: #{_forward.1} parent=5 // pred_check_branch
        %177 = sbr.rel (%p175) target = $region32
      $region31: #{_forward.1} parent=5 // pred_region
        // Predicated region
        $region33: #{_forward.1} parent=31 // pred_check
          %p178 = pneg %p31
        $region34: #{_forward.1} parent=31 // pred_check_branch
          %180 = sbr.rel (%p178) target = $region36
        $region35: #{_forward.1} parent=31 // pred_region
          %s181 = smul.u32 4, %s11
          %s182 = ssub.s32 5, %s181
          %p183 = scmp.lt.s32.totalorder %s182, 4
          %s184 = scalar_select %p183, %s182, 4
          %s185 = smul.u32 128, %s184
          %p186 = scmp.lt.s32.totalorder %s181, 4
          %s187 = scalar_select %p186, %s181, 4
          %s188 = smul.addr %s187, 8
          %s189 = scalar_lea.vmem %s0, %s188
          %s190 = smul.u32 4, %s11
          %s191 = ssub.s32 5, %s190
          %p192 = scmp.lt.s32.totalorder %s191, 4
          %s193 = scalar_select %p192, %s191, 4
          %s194 = smul.u32 128, %s193
        $region36: #{_forward.1} parent=31 // pred_fallthru
          _
      $region32: #{_forward.1} parent=5 // pred_fallthru
        _
      %p195 = scmp.le.s32.totalorder 1, %s11
      %p196 = scmp.lt.s32.totalorder %s11, 3
      %p197 = pnand %p195, %p196
      %p198 = pneg %p197
      // Predicated region
      $region37: #{_forward.1} parent=5 // pred_check
        _
      $region38: #{_forward.1} parent=5 // pred_check_branch
        %200 = sbr.rel (%p197) target = $region40
      $region39: #{_forward.1} parent=5 // pred_region
        %s201 = ssub.s32 %s11, 1
        %s202 = smul.u32 4, %s16
        %s203 = ssub.s32 5, %s202
        %p204 = scmp.lt.s32.totalorder %s203, 4
        %s205 = scalar_select %p204, %s203, 4
        %s206 = smul.u32 128, %s205
        %p207 = scmp.lt.s32.totalorder %s202, 4
        %s208 = scalar_select %p207, %s202, 4
        %s209 = smul.addr %s208, 8
        %s210 = scalar_lea.vmem %s0, %s209
        %p211 = pneg %p37
        %p212 = pneg %p34
        %p213 = pneg %p58
        %p214 = pneg %p55
        %p215 = pneg %p79
        %p216 = pneg %p76
        %p217 = pneg %p100
        %p218 = pneg %p97
        %p219 = pneg %p121
        %p220 = pneg %p118
        %p221 = pneg %p147
        %p222 = pneg %p144
        %s223 = sand.u32 %s134, 1
        %s224 = sand.u32 %s134, 1
        %s225 = smul.addr %s224, 32
        %s226 = scalar_lea.vmem [#allocation2], %s225
        %s227 = smul.u32 4, %s16
        %s228 = ssub.s32 5, %s227
        %p229 = scmp.lt.s32.totalorder %s228, 4
        %s230 = scalar_select %p229, %s228, 4
        %s231 = smul.u32 128, %s230
        %p232 = scmp.lt.s32.totalorder %s227, 4
        %s233 = scalar_select %p232, %s227, 4
        %s234 = smul.addr %s233, 8
        %s235 = scalar_lea.vmem %s0, %s234
        %s236 = smul.u32 4, %s16
        %s237 = ssub.s32 5, %s236
        %p238 = scmp.lt.s32.totalorder %s237, 4
        %s239 = scalar_select %p238, %s237, 4
        %s240 = smul.u32 128, %s239
        %s241 = smul.u32 4, %s16
        %s242 = ssub.s32 5, %s241
        %p243 = scmp.lt.s32.totalorder %s242, 4
        %s244 = scalar_select %p243, %s242, 4
        %s245 = smul.u32 128, %s244
        %v247 = vld [vmem:[%s235] sm:$0xff]
        %v248 = vld [vmem:[%s235 + $0x8] sm:$0xff]
        %v249 = vld [vmem:[%s235 + $0x10] sm:$0xff]
        %v250 = vld [vmem:[%s235 + $0x18] sm:$0xff]
        %v251 = vpack.c.bf16 %v248, %v247
        %v252 = vpack.c.bf16 %v250, %v249
        %v253 = vld [vmem:[%s1] sm:$0xf]
        %v254 = vld [vmem:[%s1 + $0x4] sm:$0xf]
        %v255 = vld [vmem:[%s1 + $0x8] sm:$0xf]
        %v256 = vld [vmem:[%s1 + $0xc] sm:$0xf]
        %v257 = vld [vmem:[%s2] sm:$0x1]
        %v259 = vlaneseq
        %v260 = vshrl.u32 %v259, 7
        %v261 = vsub.s32 0, %v260
        %v262 = vrot.slane %v257, %v261
        %v268 = vunpack.c.l.b16 %v253
        %v269 = vunpack.c.l.b16 %v254
        %v270 = vunpack.c.l.b16 %v255
        %v271 = vunpack.c.l.b16 %v256
        %v272 = vpack.c.b16 %v269, %v268
        %v273 = vpack.c.b16 %v271, %v270
        %vm276 = vcmask 261120
        %v278 = vsel %vm276, %v251, 0
        %v281 = vsel %vm276, %v252, 0
        %283 = vmatprep.subr.bf16.mxu0 0
        %284 = vmatpush1.bf16.msra.mxu0 0
        %285 = vmatprep.subr.bf16.mxu0 0
        %286 = vmatpush1.bf16.msra.mxu0 0
        %287 = vmatprep.subr.bf16.mxu0 0
        %288 = vmatpush1.bf16.msra.mxu0 0
        %289 = vmatprep.subr.bf16.mxu0 0
        %290 = vmatpush1.bf16.msra.mxu0 0
        %291 = vmatprep.subr.bf16.mxu0 0
        %292 = vmatpush1.bf16.msra.mxu0 0
        %293 = vmatprep.subr.bf16.mxu0 0
        %294 = vmatpush1.bf16.msra.mxu0 0
        %295 = vmatprep.subr.bf16.mxu0 0
        %296 = vmatpush1.bf16.msra.mxu0 %v273
        %297 = vmatprep.subr.bf16.mxu0 0
        %298 = vmatpush1.bf16.msra.mxu0 %v272
        %299 = vmatprep.subr.bf16.mxu0 0
        %300 = vmatpush2.bf16.msra.mxu0 0
        %301 = vmatprep.subr.bf16.mxu0 0
        %302 = vmatpush2.bf16.msra.mxu0 0
        %303 = vmatprep.subr.bf16.mxu0 0
        %304 = vmatpush2.bf16.msra.mxu0 0
        %305 = vmatprep.subr.bf16.mxu0 0
        %306 = vmatpush2.bf16.msra.mxu0 0
        %307 = vmatprep.subr.bf16.mxu0 0
        %308 = vmatpush2.bf16.msra.mxu0 0
        %309 = vmatprep.subr.bf16.mxu0 0
        %310 = vmatpush2.bf16.msra.mxu0 0
        %311 = vmatprep.subr.bf16.mxu0 0
        %312 = vmatpush2.bf16.msra.mxu0 0
        %313 = vmatprep.subr.bf16.mxu0 0
        %314 = vmatpush2.bf16.msra.mxu0 0
        %315 = vmatprep.mubr.bf16.mxu0 0
        %316 = vmatmul.mubr.bf16.gmra.mxu0 %v278
        %v317 = vpop.f32.mrf.mxu0
        %v318 = vadd.f32 %v262, %v317
        %v319 = vpop.f32.mrf.mxu0
        %v320 = vpop.f32.mrf.mxu0
        %v321 = vadd.f32 %v262, %v320
        %v322 = vpop.f32.mrf.mxu0
        %323 = vmatprep.mubr.bf16.mxu0 0
        %324 = vmatmul.mubr.bf16.gmra.mxu0 %v281
        %v325 = vpop.f32.mrf.mxu0
        %v326 = vadd.f32 %v262, %v325
        %v327 = vpop.f32.mrf.mxu0
        %v328 = vpop.f32.mrf.mxu0
        %v329 = vadd.f32 %v262, %v328
        %v330 = vpop.f32.mrf.mxu0
        %331 = vdwg.mxu0
        %v332 = vmul.f32 %v318, %v318
        %v333 = vmul.f32 %v321, %v321
        %v334 = vmul.f32 %v326, %v326
        %v335 = vmul.f32 %v329, %v329
        %v336 = vmul.f32 %v318, %v332
        %v337 = vmul.f32 %v321, %v333
        %v338 = vmul.f32 %v326, %v334
        %v339 = vmul.f32 %v329, %v335
        %v340 = vmul.f32 %v336, 0.044715
        %v341 = vmul.f32 %v337, 0.044715
        %v342 = vmul.f32 %v338, 0.044715
        %v343 = vmul.f32 %v339, 0.044715
        %v344 = vadd.f32 %v318, %v340
        %v345 = vadd.f32 %v321, %v341
        %v346 = vadd.f32 %v326, %v342
        %v347 = vadd.f32 %v329, %v343
        %v348 = vmul.f32 %v344, 0.7978846
        %v349 = vmul.f32 %v345, 0.7978846
        %v350 = vmul.f32 %v346, 0.7978846
        %v351 = vmul.f32 %v347, 0.7978846
        %v352 = vtanh.pop %v348
        %v353 = vtanh.pop %v349
        %v354 = vtanh.pop %v350
        %v355 = vtanh.pop %v351
        %v356 = vadd.f32 %v352, 1.0
        %v357 = vadd.f32 %v353, 1.0
        %v358 = vadd.f32 %v354, 1.0
        %v359 = vadd.f32 %v355, 1.0
        %v360 = vmul.f32 %v356, 0.5
        %v361 = vmul.f32 %v357, 0.5
        %v362 = vmul.f32 %v358, 0.5
        %v363 = vmul.f32 %v359, 0.5
        %v364 = vmul.f32 %v318, %v360
        %v365 = vmul.f32 %v321, %v361
        %v366 = vmul.f32 %v326, %v362
        %v367 = vmul.f32 %v329, %v363
        %v368 = vpack.c.bf16 %v365, %v364
        %v369 = vpack.c.bf16 %v367, %v366
        %v370 = vld [vmem:[%s3] sm:$0xf]
        %v371 = vld [vmem:[%s3 + $0x4] sm:$0xf]
        %v372 = vld [vmem:[%s3 + $0x8] sm:$0xf]
        %v373 = vld [vmem:[%s3 + $0xc] sm:$0xf]
        %v374 = vld [vmem:[%s3 + $0x10] sm:$0xf]
        %v375 = vld [vmem:[%s3 + $0x14] sm:$0xf]
        %v376 = vld [vmem:[%s3 + $0x18] sm:$0xf]
        %v377 = vld [vmem:[%s3 + $0x1c] sm:$0xf]
        %v378 = vld [vmem:[%s4] sm:$0x1]
        %v380 = vlaneseq
        %v381 = vshrl.u32 %v380, 7
        %v382 = vsub.s32 0, %v381
        %v383 = vrot.slane %v378, %v382
        %v393 = vunpack.c.l.b16 %v370
        %v394 = vunpack.c.l.b16 %v371
        %v395 = vunpack.c.l.b16 %v372
        %v396 = vunpack.c.l.b16 %v373
        %v397 = vunpack.c.l.b16 %v374
        %v398 = vunpack.c.l.b16 %v375
        %v399 = vunpack.c.l.b16 %v376
        %v400 = vunpack.c.l.b16 %v377
        %v401 = vpack.c.b16 %v394, %v393
        %v402 = vpack.c.b16 %v396, %v395
        %v403 = vpack.c.b16 %v398, %v397
        %v404 = vpack.c.b16 %v400, %v399
        %vm409 = vcmask 523264
        %v411 = vsel %vm409, %v368, 0
        %v414 = vsel %vm409, %v369, 0
        %416 = vmatprep.subr.bf16.mxu0 0
        %417 = vmatpush1.bf16.msra.mxu0 0
        %418 = vmatprep.subr.bf16.mxu0 0
        %419 = vmatpush1.bf16.msra.mxu0 0
        %420 = vmatprep.subr.bf16.mxu0 0
        %421 = vmatpush1.bf16.msra.mxu0 0
        %422 = vmatprep.subr.bf16.mxu0 0
        %423 = vmatpush1.bf16.msra.mxu0 0
        %424 = vmatprep.subr.bf16.mxu0 0
        %425 = vmatpush1.bf16.msra.mxu0 %v404
        %426 = vmatprep.subr.bf16.mxu0 0
        %427 = vmatpush1.bf16.msra.mxu0 %v403
        %428 = vmatprep.subr.bf16.mxu0 0
        %429 = vmatpush1.bf16.msra.mxu0 %v402
        %430 = vmatprep.subr.bf16.mxu0 0
        %431 = vmatpush1.bf16.msra.mxu0 %v401
        %432 = vmatprep.subr.bf16.mxu0 0
        %433 = vmatpush2.bf16.msra.mxu0 0
        %434 = vmatprep.subr.bf16.mxu0 0
        %435 = vmatpush2.bf16.msra.mxu0 0
        %436 = vmatprep.subr.bf16.mxu0 0
        %437 = vmatpush2.bf16.msra.mxu0 0
        %438 = vmatprep.subr.bf16.mxu0 0
        %439 = vmatpush2.bf16.msra.mxu0 0
        %440 = vmatprep.subr.bf16.mxu0 0
        %441 = vmatpush2.bf16.msra.mxu0 0
        %442 = vmatprep.subr.bf16.mxu0 0
        %443 = vmatpush2.bf16.msra.mxu0 0
        %444 = vmatprep.subr.bf16.mxu0 0
        %445 = vmatpush2.bf16.msra.mxu0 0
        %446 = vmatprep.subr.bf16.mxu0 0
        %447 = vmatpush2.bf16.msra.mxu0 0
        %448 = vmatprep.mubr.bf16.mxu0 0
        %449 = vmatmul.mubr.bf16.gmra.mxu0 %v411
        %v450 = vpop.f32.mrf.mxu0
        %v451 = vadd.f32 %v383, %v450
        %v452 = vpop.f32.mrf.mxu0
        %v453 = vpop.f32.mrf.mxu0
        %v454 = vadd.f32 %v383, %v453
        %v455 = vpop.f32.mrf.mxu0
        %456 = vmatprep.mubr.bf16.mxu0 0
        %457 = vmatmul.mubr.bf16.gmra.mxu0 %v414
        %v458 = vpop.f32.mrf.mxu0
        %v459 = vadd.f32 %v383, %v458
        %v460 = vpop.f32.mrf.mxu0
        %v461 = vpop.f32.mrf.mxu0
        %v462 = vadd.f32 %v383, %v461
        %v463 = vpop.f32.mrf.mxu0
        %464 = vdwg.mxu0
        %v465 = vmul.f32 %v451, %v451
        %v466 = vmul.f32 %v454, %v454
        %v467 = vmul.f32 %v459, %v459
        %v468 = vmul.f32 %v462, %v462
        %v469 = vsel %vm276, %v465, 0.0
        %470 = vadd.xlane.f32.xlu0 %v469
        %v471 = vpop.xlane.xlu0 %470
        %v472 = vsel %vm276, %v466, 0.0
        %473 = vadd.xlane.f32.xlu0 %v472
        %v474 = vpop.xlane.xlu0 %473
        %v475 = vsel %vm276, %v467, 0.0
        %476 = vadd.xlane.f32.xlu0 %v475
        %v477 = vpop.xlane.xlu0 %476
        %v478 = vsel %vm276, %v468, 0.0
        %479 = vadd.xlane.f32.xlu0 %v478
        %v480 = vpop.xlane.xlu0 %479
        %v481 = vadd.f32 %v471, 1e-12
        %v482 = vadd.f32 %v474, 1e-12
        %v483 = vadd.f32 %v477, 1e-12
        %v484 = vadd.f32 %v480, 1e-12
        %v485 = vrsqrt.pop %v481
        %v486 = vrsqrt.pop %v482
        %v487 = vrsqrt.pop %v483
        %v488 = vrsqrt.pop %v484
        %v489 = vmul.f32 %v451, %v485
        %v490 = vmul.f32 %v454, %v486
        %v491 = vmul.f32 %v459, %v487
        %v492 = vmul.f32 %v462, %v488
        %493 = vst.msk [vmem:[%s226] sm:$0xff] %vm276, %v489
        %494 = vst.msk [vmem:[%s226 + $0x8] sm:$0xff] %vm276, %v490
        %495 = vst.msk [vmem:[%s226 + $0x10] sm:$0xff] %vm276, %v491
        %496 = vst.msk [vmem:[%s226 + $0x18] sm:$0xff] %vm276, %v492
        %s497 = sand.u32 %s134, 1
        %s498 = sand.u32 %s134, 1
        %s499 = smul.addr %s498, 32
        %s500 = scalar_lea.vmem [#allocation2], %s499
        // Predicated region
        $region41: #{_forward.1} parent=39 // pred_check
          %p501 = pneg %p144
        $region42: #{_forward.1} parent=39 // pred_check_branch
          %503 = sbr.rel (%p501) target = $region44
        $region43: #{_forward.1} parent=39 // pred_region
          %s504 = smul.u32 4, %s16
          %s505 = ssub.s32 5, %s504
          %p506 = scmp.lt.s32.totalorder %s505, 4
          %s507 = scalar_select %p506, %s505, 4
          %s508 = smul.u32 128, %s507
          %p509 = scmp.ne.s32.totalorder 0, %s508
          %s510 = smul.addr %s504, 8
          %s511 = scalar_lea.vmem %s5, %s510
          // Predicated region
          $region45: #{_forward.1} parent=43 // pred_check
            %p512 = pneg %p509
          $region46: #{_forward.1} parent=43 // pred_check_branch
            %514 = sbr.rel (%p512) target = $region48
          $region47: #{_forward.1} parent=43 // pred_region
            // Predicated region
            $region49: #{_forward.1} parent=47 // pred_check
              _
            $region50: #{_forward.1} parent=47 // pred_check_branch
              %516 = sbr.rel (0) target = $region52
            $region51: #{_forward.1} parent=47 // pred_region
              // Predicated region
              $region71: #{_forward.1} parent=51 // pred_check
                _
              $region72: #{_forward.1} parent=51 // pred_check_branch
                %572 = sbr.rel (0) target = $region74
              $region73: #{_forward.1} parent=51 // pred_region
                %s573 = sshrl.u32 %s507, 2
                // While loop
                $region75: #{_forward.1} parent=73 // loop_pre_header
                  _
                $region76: #{_forward.1} parent=73 // loop_header
                  %s575 = sphi 0, %s577
                  %p576 = scmp.ge.s32.totalorder %s575, %s573
                  %s580 = sphi 0, %s593
                  %s581 = sphi %s500, %s596
                  %s582 = sphi %s511, %s597
                $region77: #{_forward.1} parent=73 // loop_header_branch
                  %579 = sbr.rel (%p576) target = $region81
                $region78: #{_forward.1} parent=73 // loop_body
                  %v583 = vld [vmem:[%s581] sm:$0xff]
                  %584 = vst [vmem:[%s582] sm:$0xff] %v583
                  %v585 = vld [vmem:[%s581 + $0x8] sm:$0xff]
                  %586 = vst [vmem:[%s582 + $0x8] sm:$0xff] %v585
                  %v587 = vld [vmem:[%s581 + $0x10] sm:$0xff]
                  %588 = vst [vmem:[%s582 + $0x10] sm:$0xff] %v587
                  %v589 = vld [vmem:[%s581 + $0x18] sm:$0xff]
                  %590 = vst [vmem:[%s582 + $0x18] sm:$0xff] %v589
                  %s591 = sadd.s32 1, %s580
                  %p592 = scmp.ge.s32.totalorder %s591, %s573
                  %s593 = scalar_select %p592, 0, %s591
                  %s594 = smul.u32 %s593, 32
                  %s595 = smul.u32 %s593, 32
                  %s596 = scalar_lea.vmem %s500, %s594 [#allocation2]
                  %s597 = scalar_lea.vmem %s511, %s595
                $region79: #{_forward.1} parent=73 // loop_footer
                  %s577 = sadd.s32 %s575, 1
                $region80: #{_forward.1} parent=73 // loop_footer_branch
                  %574 = sbr.rel target = $region76
                $region81: #{_forward.1} parent=73 // loop_exit
                  _
                %s598 = sshrl.u32 %s507, 2
                %s599 = sand.u32 %s507, 3
                %s600 = smul.u32 %s598, 4
                %s601 = smul.u32 8, %s600
                %s602 = scalar_lea.vmem %s500, %s601 [#allocation2]
                %s603 = smul.u32 8, %s600
                %s604 = scalar_lea.vmem %s511, %s603
                // While loop
                $region82: #{_forward.1} parent=73 // loop_pre_header
                  _
                $region83: #{_forward.1} parent=73 // loop_header
                  %s606 = sphi 0, %s608
                  %p607 = scmp.ge.s32.totalorder %s606, %s599
                  %s611 = sphi 0, %s618
                  %s612 = sphi %s602, %s621
                  %s613 = sphi %s604, %s622
                $region84: #{_forward.1} parent=73 // loop_header_branch
                  %610 = sbr.rel (%p607) target = $region88
                $region85: #{_forward.1} parent=73 // loop_body
                  %v614 = vld [vmem:[%s612] sm:$0xff]
                  %615 = vst [vmem:[%s613] sm:$0xff] %v614
                  %s616 = sadd.s32 1, %s611
                  %p617 = scmp.ge.s32.totalorder %s616, %s599
                  %s618 = scalar_select %p617, 0, %s616
                  %s619 = smul.u32 %s618, 8
                  %s620 = smul.u32 %s618, 8
                  %s621 = scalar_lea.vmem %s602, %s619 [#allocation2]
                  %s622 = scalar_lea.vmem %s604, %s620
                $region86: #{_forward.1} parent=73 // loop_footer
                  %s608 = sadd.s32 %s606, 1
                $region87: #{_forward.1} parent=73 // loop_footer_branch
                  %605 = sbr.rel target = $region83
                $region88: #{_forward.1} parent=73 // loop_exit
                  _
              $region74: #{_forward.1} parent=51 // pred_fallthru
                _
              // Predicated region
              $region89: #{_forward.1} parent=51 // pred_check
                _
              $region90: #{_forward.1} parent=51 // pred_check_branch
                %624 = sbr.rel target = $region92
              $region91: #{_forward.1} parent=51 // pred_region
                _
              $region92: #{_forward.1} parent=51 // pred_fallthru
                _
            $region52: #{_forward.1} parent=47 // pred_fallthru
              _
            // Predicated region
            $region53: #{_forward.1} parent=47 // pred_check
              _
            $region54: #{_forward.1} parent=47 // pred_check_branch
              %518 = sbr.rel target = $region56
            $region55: #{_forward.1} parent=47 // pred_region
              %s520 = ssub.s32 256, 1
              %s521 = sshrl.u32 %s507, 2
              // While loop
              $region57: #{_forward.1} parent=55 // loop_pre_header
                _
              $region58: #{_forward.1} parent=55 // loop_header
                %s523 = sphi 0, %s525
                %p524 = scmp.ge.s32.totalorder %s523, %s521
                %s528 = sphi 0, %s541
                %s529 = sphi %s500, %s544
                %s530 = sphi %s511, %s545
              $region59: #{_forward.1} parent=55 // loop_header_branch
                %527 = sbr.rel (%p524) target = $region63
              $region60: #{_forward.1} parent=55 // loop_body
                %v531 = vld [vmem:[%s529] sm:%s520]
                %532 = vst [vmem:[%s530] sm:%s520] %v531
                %v533 = vld [vmem:[%s529 + $0x8] sm:%s520]
                %534 = vst [vmem:[%s530 + $0x8] sm:%s520] %v533
                %v535 = vld [vmem:[%s529 + $0x10] sm:%s520]
                %536 = vst [vmem:[%s530 + $0x10] sm:%s520] %v535
                %v537 = vld [vmem:[%s529 + $0x18] sm:%s520]
                %538 = vst [vmem:[%s530 + $0x18] sm:%s520] %v537
                %s539 = sadd.s32 1, %s528
                %p540 = scmp.ge.s32.totalorder %s539, %s521
                %s541 = scalar_select %p540, 0, %s539
                %s542 = smul.u32 %s541, 32
                %s543 = smul.u32 %s541, 32
                %s544 = scalar_lea.vmem %s500, %s542 [#allocation2]
                %s545 = scalar_lea.vmem %s511, %s543
              $region61: #{_forward.1} parent=55 // loop_footer
                %s525 = sadd.s32 %s523, 1
              $region62: #{_forward.1} parent=55 // loop_footer_branch
                %522 = sbr.rel target = $region58
              $region63: #{_forward.1} parent=55 // loop_exit
                _
              %s546 = sshrl.u32 %s507, 2
              %s547 = sand.u32 %s507, 3
              %s548 = smul.u32 %s546, 4
              %s549 = smul.u32 8, %s548
              %s550 = scalar_lea.vmem %s500, %s549 [#allocation2]
              %s551 = smul.u32 8, %s548
              %s552 = scalar_lea.vmem %s511, %s551
              // While loop
              $region64: #{_forward.1} parent=55 // loop_pre_header
                _
              $region65: #{_forward.1} parent=55 // loop_header
                %s554 = sphi 0, %s556
                %p555 = scmp.ge.s32.totalorder %s554, %s547
                %s559 = sphi 0, %s566
                %s560 = sphi %s550, %s569
                %s561 = sphi %s552, %s570
              $region66: #{_forward.1} parent=55 // loop_header_branch
                %558 = sbr.rel (%p555) target = $region70
              $region67: #{_forward.1} parent=55 // loop_body
                %v562 = vld [vmem:[%s560] sm:%s520]
                %563 = vst [vmem:[%s561] sm:%s520] %v562
                %s564 = sadd.s32 1, %s559
                %p565 = scmp.ge.s32.totalorder %s564, %s547
                %s566 = scalar_select %p565, 0, %s564
                %s567 = smul.u32 %s566, 8
                %s568 = smul.u32 %s566, 8
                %s569 = scalar_lea.vmem %s550, %s567 [#allocation2]
                %s570 = scalar_lea.vmem %s552, %s568
              $region68: #{_forward.1} parent=55 // loop_footer
                %s556 = sadd.s32 %s554, 1
              $region69: #{_forward.1} parent=55 // loop_footer_branch
                %553 = sbr.rel target = $region65
              $region70: #{_forward.1} parent=55 // loop_exit
                _
            $region56: #{_forward.1} parent=47 // pred_fallthru
              _
          $region48: #{_forward.1} parent=43 // pred_fallthru
            _
          %625 = vnop
        $region44: #{_forward.1} parent=39 // pred_fallthru
          _
      $region40: #{_forward.1} parent=5 // pred_fallthru
        _
      %p626 = scmp.le.s32.totalorder 2, %s11
      // Predicated region
      $region93: #{_forward.1} parent=5 // pred_check
        %p627 = pneg %p626
      $region94: #{_forward.1} parent=5 // pred_check_branch
        %629 = sbr.rel (%p627) target = $region96
      $region95: #{_forward.1} parent=5 // pred_region
        %s630 = ssub.s32 %s11, 2
        // Predicated region
        $region97: #{_forward.1} parent=95 // pred_check
          %p631 = pneg %p150
        $region98: #{_forward.1} parent=95 // pred_check_branch
          %633 = sbr.rel (%p631) target = $region100
        $region99: #{_forward.1} parent=95 // pred_region
          %s634 = sand.u32 %s135, 1
          %s635 = sand.u32 %s135, 1
          %s636 = smul.addr %s635, 32
          %s637 = scalar_lea.vmem [#allocation2], %s636
        $region100: #{_forward.1} parent=95 // pred_fallthru
          _
      $region96: #{_forward.1} parent=5 // pred_fallthru
        _
    $region6: #{_forward.1} parent=1 // loop_footer
      %s15 = sadd.s32 1, %s11
    $region7: #{_forward.1} parent=1 // loop_footer_branch
      %10 = sbr.rel target = $region3
    $region8: #{_forward.1} parent=1 // loop_exit
      _

// kernel: _forward.1
$region0: #{_forward.1}
  #allocation0 [shape = 'u32[]', space=smem, size = 0x4, offset = 0x4, fixed_abs, tag = 'smem constant byte address 0x4 - core index']
  #allocation1 [shape = 'u32[144,128]{1,0:T(1,128)}', space=vmem, size = 0x12000, scoped, tag = 'internal scratch']
  %s0 = inlined_call_operand.vmem [shape: f32[40,32], index: 0, kind: input, shape index: {}]
  %s1 = inlined_call_operand.vmem [shape: bf16[32,64], index: 1, kind: input, shape index: {}]
  %s2 = inlined_call_operand.vmem [shape: f32[1,64], index: 2, kind: input, shape index: {}]
  %s3 = inlined_call_operand.vmem [shape: bf16[64,32], index: 3, kind: input, shape index: {}]
  %s4 = inlined_call_operand.vmem [shape: f32[1,32], index: 4, kind: input, shape index: {}]
  %s5 = inlined_call_operand.vmem [shape: f32[40,32], index: 5, kind: output, shape index: {}]
  %s6 = sld [smem:[#allocation0]]
  $region101: #{_forward.1} parent=0
    _
  %s8 = ssub.s32 1, %s6
  %s9 = scalar_select 0, %s8, %s6
  $region1: #{_forward.1} parent=0
    #allocation2 [shape = 'u8[32768]{0}', space=vmem, size = 0x8000, scoped, tag = 'output window, operand 0']
    loop: start=0, step=1, limit=4
    $region2: #{_forward.1} parent=1 // loop_pre_header
      _
    $region3: #{_forward.1} parent=1 // loop_header
      %s11 = sphi 0, %s15
      %p12 = scmp.ge.s32.totalorder %s11, 4
      %s21 = sphi 0, %s23
      %s24 = sphi 0, %s21
      %s25 = sphi 0, %s24
      %s41 = sphi 0, %s25
      %s45 = sphi 0, %s45
      %s47 = sphi 0, %s45
      %s48 = sphi 0, %s47
      %s62 = sphi 0, %s48
      %s66 = sphi 0, %s66
      %s68 = sphi 0, %s66
      %s69 = sphi 0, %s68
      %s83 = sphi 0, %s69
      %s87 = sphi 0, %s87
      %s89 = sphi 0, %s87
      %s90 = sphi 0, %s89
      %s104 = sphi 0, %s90
      %s108 = sphi 0, %s108
      %s110 = sphi 0, %s108
      %s111 = sphi 0, %s110
      %s125 = sphi 0, %s111
      %s131 = sphi 0, %s133
      %s134 = sphi 0, %s131
      %s135 = sphi 0, %s134
      %s151 = sphi 0, %s135
    $region4: #{_forward.1} parent=1 // loop_header_branch
      %14 = sbr.rel (%p12) target = $region8
    $region5: #{_forward.1} parent=1 // loop_body
      %s16 = ssub.s32 %s11, 1
      %s17 = ssub.s32 %s11, 2
      %s18 = sadd.s32 %s11, 1
      %s19 = ssub.s32 %s11, %s18
      %p20 = scmp.eq.s32.totalorder %s19, 0
      %s22 = sadd.s32 %s21, 1
      %s23 = scalar_select %p20, %s21, %s22
      %p26 = pneg %p20
      %p27 = scmp.eq.s32.totalorder %s11, 1
      %p28 = por %p26, %p27
      %p29 = scmp.ne.s32.totalorder %s21, %s24
      %p30 = scmp.eq.s32.totalorder %s11, 0
      %p31 = por %p29, %p30
      %p32 = scmp.ne.s32.totalorder %s21, %s24
      %p33 = scmp.eq.s32.totalorder %s16, 1
      %p34 = por %p32, %p33
      %p35 = scmp.ne.s32.totalorder %s24, %s25
      %p36 = scmp.eq.s32.totalorder %s16, 0
      %p37 = por %p35, %p36
      %p38 = scmp.ne.s32.totalorder %s24, %s25
      %p39 = scmp.eq.s32.totalorder %s17, 1
      %p40 = por %p38, %p39
      %p42 = scmp.ne.s32.totalorder %s25, %s41
      %p43 = scmp.eq.s32.totalorder %s17, 0
      %p44 = por %p42, %p43
      %s46 = sadd.s32 %s45, 1
      %p49 = scmp.eq.s32.totalorder %s11, 1
      %p50 = scmp.ne.s32.totalorder %s45, %s47
      %p51 = scmp.eq.s32.totalorder %s11, 0
      %p52 = por %p50, %p51
      %p53 = scmp.ne.s32.totalorder %s45, %s47
      %p54 = scmp.eq.s32.totalorder %s16, 1
      %p55 = por %p53, %p54
      %p56 = scmp.ne.s32.totalorder %s47, %s48
      %p57 = scmp.eq.s32.totalorder %s16, 0
      %p58 = por %p56, %p57
      %p59 = scmp.ne.s32.totalorder %s47, %s48
      %p60 = scmp.eq.s32.totalorder %s17, 1
      %p61 = por %p59, %p60
      %p63 = scmp.ne.s32.totalorder %s48, %s62
      %p64 = scmp.eq.s32.totalorder %s17, 0
      %p65 = por %p63, %p64
      %s67 = sadd.s32 %s66, 1
      %p70 = scmp.eq.s32.totalorder %s11, 1
      %p71 = scmp.ne.s32.totalorder %s66, %s68
      %p72 = scmp.eq.s32.totalorder %s11, 0
      %p73 = por %p71, %p72
      %p74 = scmp.ne.s32.totalorder %s66, %s68
      %p75 = scmp.eq.s32.totalorder %s16, 1
      %p76 = por %p74, %p75
      %p77 = scmp.ne.s32.totalorder %s68, %s69
      %p78 = scmp.eq.s32.totalorder %s16, 0
      %p79 = por %p77, %p78
      %p80 = scmp.ne.s32.totalorder %s68, %s69
      %p81 = scmp.eq.s32.totalorder %s17, 1
      %p82 = por %p80, %p81
      %p84 = scmp.ne.s32.totalorder %s69, %s83
      %p85 = scmp.eq.s32.totalorder %s17, 0
      %p86 = por %p84, %p85
      %s88 = sadd.s32 %s87, 1
      %p91 = scmp.eq.s32.totalorder %s11, 1
      %p92 = scmp.ne.s32.totalorder %s87, %s89
      %p93 = scmp.eq.s32.totalorder %s11, 0
      %p94 = por %p92, %p93
      %p95 = scmp.ne.s32.totalorder %s87, %s89
      %p96 = scmp.eq.s32.totalorder %s16, 1
      %p97 = por %p95, %p96
      %p98 = scmp.ne.s32.totalorder %s89, %s90
      %p99 = scmp.eq.s32.totalorder %s16, 0
      %p100 = por %p98, %p99
      %p101 = scmp.ne.s32.totalorder %s89, %s90
      %p102 = scmp.eq.s32.totalorder %s17, 1
      %p103 = por %p101, %p102
      %p105 = scmp.ne.s32.totalorder %s90, %s104
      %p106 = scmp.eq.s32.totalorder %s17, 0
      %p107 = por %p105, %p106
      %s109 = sadd.s32 %s108, 1
      %p112 = scmp.eq.s32.totalorder %s11, 1
      %p113 = scmp.ne.s32.totalorder %s108, %s110
      %p114 = scmp.eq.s32.totalorder %s11, 0
      %p115 = por %p113, %p114
      %p116 = scmp.ne.s32.totalorder %s108, %s110
      %p117 = scmp.eq.s32.totalorder %s16, 1
      %p118 = por %p116, %p117
      %p119 = scmp.ne.s32.totalorder %s110, %s111
      %p120 = scmp.eq.s32.totalorder %s16, 0
      %p121 = por %p119, %p120
      %p122 = scmp.ne.s32.totalorder %s110, %s111
      %p123 = scmp.eq.s32.totalorder %s17, 1
      %p124 = por %p122, %p123
      %p126 = scmp.ne.s32.totalorder %s111, %s125
      %p127 = scmp.eq.s32.totalorder %s17, 0
      %p128 = por %p126, %p127
      %s129 = ssub.s32 %s11, %s18
      %p130 = scmp.eq.s32.totalorder %s129, 0
      %s132 = sadd.s32 %s131, 1
      %s133 = scalar_select %p130, %s131, %s132
      %p136 = pneg %p130
      %p137 = scmp.eq.s32.totalorder %s11, 1
      %p138 = por %p136, %p137
      %p139 = scmp.ne.s32.totalorder %s131, %s134
      %p140 = scmp.eq.s32.totalorder %s11, 0
      %p141 = por %p139, %p140
      %p142 = scmp.ne.s32.totalorder %s131, %s134
      %p143 = scmp.eq.s32.totalorder %s16, 1
      %p144 = por %p142, %p143
      %p145 = scmp.ne.s32.totalorder %s134, %s135
      %p146 = scmp.eq.s32.totalorder %s16, 0
      %p147 = por %p145, %p146
      %p148 = scmp.ne.s32.totalorder %s134, %s135
      %p149 = scmp.eq.s32.totalorder %s17, 1
      %p150 = por %p148, %p149
      %p152 = scmp.ne.s32.totalorder %s135, %s151
      %p153 = scmp.eq.s32.totalorder %s17, 0
      %p154 = por %p152, %p153
      %p155 = scmp.le.s32.totalorder 1, %s11
      %p156 = scmp.lt.s32.totalorder %s11, 3
      %p157 = pnand %p155, %p156
      %p158 = pneg %p157
      // Predicated region
      $region9: #{_forward.1} parent=5 // pred_check
        _
      $region10: #{_forward.1} parent=5 // pred_check_branch
        %160 = sbr.rel (%p157) target = $region12
      $region11: #{_forward.1} parent=5 // pred_region
        %s161 = ssub.s32 %s11, 1
        // Predicated region
        $region13: #{_forward.1} parent=11 // pred_check
          %p162 = pneg %p58
        $region14: #{_forward.1} parent=11 // pred_check_branch
          %164 = sbr.rel (%p162) target = $region16
        $region15: #{_forward.1} parent=11 // pred_region
          _
        $region16: #{_forward.1} parent=11 // pred_fallthru
          _
        // Predicated region
        $region17: #{_forward.1} parent=11 // pred_check
          %p165 = pneg %p79
        $region18: #{_forward.1} parent=11 // pred_check_branch
          %167 = sbr.rel (%p165) target = $region20
        $region19: #{_forward.1} parent=11 // pred_region
          _
        $region20: #{_forward.1} parent=11 // pred_fallthru
          _
        // Predicated region
        $region21: #{_forward.1} parent=11 // pred_check
          %p168 = pneg %p100
        $region22: #{_forward.1} parent=11 // pred_check_branch
          %170 = sbr.rel (%p168) target = $region24
        $region23: #{_forward.1} parent=11 // pred_region
          _
        $region24: #{_forward.1} parent=11 // pred_fallthru
          _
        // Predicated region
        $region25: #{_forward.1} parent=11 // pred_check
          %p171 = pneg %p121
        $region26: #{_forward.1} parent=11 // pred_check_branch
          %173 = sbr.rel (%p171) target = $region28
        $region27: #{_forward.1} parent=11 // pred_region
          _
        $region28: #{_forward.1} parent=11 // pred_fallthru
          _
      $region12: #{_forward.1} parent=5 // pred_fallthru
        _
      %p174 = scmp.lt.s32.totalorder %s11, 2
      // Predicated region
      $region29: #{_forward.1} parent=5 // pred_check
        %p175 = pneg %p174
      $region30: #{_forward.1} parent=5 // pred_check_branch
        %177 = sbr.rel (%p175) target = $region32
      $region31: #{_forward.1} parent=5 // pred_region
        // Predicated region
        $region33: #{_forward.1} parent=31 // pred_check
          %p178 = pneg %p31
        $region34: #{_forward.1} parent=31 // pred_check_branch
          %180 = sbr.rel (%p178) target = $region36
        $region35: #{_forward.1} parent=31 // pred_region
          %s181 = smul.u32 4, %s11
          %s182 = ssub.s32 5, %s181
          %p183 = scmp.lt.s32.totalorder %s182, 4
          %s184 = scalar_select %p183, %s182, 4
          %s185 = smul.u32 128, %s184
          %p186 = scmp.lt.s32.totalorder %s181, 4
          %s187 = scalar_select %p186, %s181, 4
          %s188 = smul.addr %s187, 8
          %s189 = scalar_lea.vmem %s0, %s188
          %s190 = smul.u32 4, %s11
          %s191 = ssub.s32 5, %s190
          %p192 = scmp.lt.s32.totalorder %s191, 4
          %s193 = scalar_select %p192, %s191, 4
          %s194 = smul.u32 128, %s193
        $region36: #{_forward.1} parent=31 // pred_fallthru
          _
      $region32: #{_forward.1} parent=5 // pred_fallthru
        _
      %p195 = scmp.le.s32.totalorder 1, %s11
      %p196 = scmp.lt.s32.totalorder %s11, 3
      %p197 = pnand %p195, %p196
      %p198 = pneg %p197
      // Predicated region
      $region37: #{_forward.1} parent=5 // pred_check
        _
      $region38: #{_forward.1} parent=5 // pred_check_branch
        %200 = sbr.rel (%p197) target = $region40
      $region39: #{_forward.1} parent=5 // pred_region
        %s201 = ssub.s32 %s11, 1
        %s202 = smul.u32 4, %s16
        %s203 = ssub.s32 5, %s202
        %p204 = scmp.lt.s32.totalorder %s203, 4
        %s205 = scalar_select %p204, %s203, 4
        %s206 = smul.u32 128, %s205
        %p207 = scmp.lt.s32.totalorder %s202, 4
        %s208 = scalar_select %p207, %s202, 4
        %s209 = smul.addr %s208, 8
        %s210 = scalar_lea.vmem %s0, %s209
        %p211 = pneg %p37
        %p212 = pneg %p34
        %p213 = pneg %p58
        %p214 = pneg %p55
        %p215 = pneg %p79
        %p216 = pneg %p76
        %p217 = pneg %p100
        %p218 = pneg %p97
        %p219 = pneg %p121
        %p220 = pneg %p118
        %p221 = pneg %p147
        %p222 = pneg %p144
        %s223 = sand.u32 %s134, 1
        %s224 = sand.u32 %s134, 1
        %s225 = smul.addr %s224, 32
        %s226 = scalar_lea.vmem [#allocation2], %s225
        %s227 = smul.u32 4, %s16
        %s228 = ssub.s32 5, %s227
        %p229 = scmp.lt.s32.totalorder %s228, 4
        %s230 = scalar_select %p229, %s228, 4
        %s231 = smul.u32 128, %s230
        %p232 = scmp.lt.s32.totalorder %s227, 4
        %s233 = scalar_select %p232, %s227, 4
        %s234 = smul.addr %s233, 8
        %s235 = scalar_lea.vmem %s0, %s234
        %s236 = smul.u32 4, %s16
        %s237 = ssub.s32 5, %s236
        %p238 = scmp.lt.s32.totalorder %s237, 4
        %s239 = scalar_select %p238, %s237, 4
        %s240 = smul.u32 128, %s239
        %s241 = smul.u32 4, %s16
        %s242 = ssub.s32 5, %s241
        %p243 = scmp.lt.s32.totalorder %s242, 4
        %s244 = scalar_select %p243, %s242, 4
        %s245 = smul.u32 128, %s244
        %v247 = vld [vmem:[%s235] sm:$0xff]
        %v248 = vld [vmem:[%s235 + $0x8] sm:$0xff]
        %v249 = vld [vmem:[%s235 + $0x10] sm:$0xff]
        %v250 = vld [vmem:[%s235 + $0x18] sm:$0xff]
        %v251 = vpack.c.bf16 %v248, %v247
        %v252 = vpack.c.bf16 %v250, %v249
        %v253 = vld [vmem:[%s1] sm:$0xf]
        %v254 = vld [vmem:[%s1 + $0x4] sm:$0xf]
        %v255 = vld [vmem:[%s1 + $0x8] sm:$0xf]
        %v256 = vld [vmem:[%s1 + $0xc] sm:$0xf]
        %v257 = vld [vmem:[%s2] sm:$0x1]
        %v259 = vlaneseq
        %v260 = vshrl.u32 %v259, 7
        %v261 = vsub.s32 0, %v260
        %v262 = vrot.slane %v257, %v261
        %v268 = vunpack.c.l.b16 %v253
        %v269 = vunpack.c.l.b16 %v254
        %v270 = vunpack.c.l.b16 %v255
        %v271 = vunpack.c.l.b16 %v256
        %v272 = vpack.c.b16 %v269, %v268
        %v273 = vpack.c.b16 %v271, %v270
        %vm276 = vcmask 261120
        %v278 = vsel %vm276, %v251, 0
        %v281 = vsel %vm276, %v252, 0
        %283 = vmatprep.subr.bf16.mxu0 0
        %284 = vmatpush1.bf16.msra.mxu0 0
        %285 = vmatprep.subr.bf16.mxu0 0
        %286 = vmatpush1.bf16.msra.mxu0 0
        %287 = vmatprep.subr.bf16.mxu0 0
        %288 = vmatpush1.bf16.msra.mxu0 0
        %289 = vmatprep.subr.bf16.mxu0 0
        %290 = vmatpush1.bf16.msra.mxu0 0
        %291 = vmatprep.subr.bf16.mxu0 0
        %292 = vmatpush1.bf16.msra.mxu0 0
        %293 = vmatprep.subr.bf16.mxu0 0
        %294 = vmatpush1.bf16.msra.mxu0 0
        %295 = vmatprep.subr.bf16.mxu0 0
        %296 = vmatpush1.bf16.msra.mxu0 %v273
        %297 = vmatprep.subr.bf16.mxu0 0
        %298 = vmatpush1.bf16.msra.mxu0 %v272
        %299 = vmatprep.subr.bf16.mxu0 0
        %300 = vmatpush2.bf16.msra.mxu0 0
        %301 = vmatprep.subr.bf16.mxu0 0
        %302 = vmatpush2.bf16.msra.mxu0 0
        %303 = vmatprep.subr.bf16.mxu0 0
        %304 = vmatpush2.bf16.msra.mxu0 0
        %305 = vmatprep.subr.bf16.mxu0 0
        %306 = vmatpush2.bf16.msra.mxu0 0
        %307 = vmatprep.subr.bf16.mxu0 0
        %308 = vmatpush2.bf16.msra.mxu0 0
        %309 = vmatprep.subr.bf16.mxu0 0
        %310 = vmatpush2.bf16.msra.mxu0 0
        %311 = vmatprep.subr.bf16.mxu0 0
        %312 = vmatpush2.bf16.msra.mxu0 0
        %313 = vmatprep.subr.bf16.mxu0 0
        %314 = vmatpush2.bf16.msra.mxu0 0
        %315 = vmatprep.mubr.bf16.mxu0 0
        %316 = vmatmul.mubr.bf16.gmra.mxu0 %v278
        %v317 = vpop.f32.mrf.mxu0
        %v318 = vadd.f32 %v262, %v317
        %v319 = vpop.f32.mrf.mxu0
        %v320 = vpop.f32.mrf.mxu0
        %v321 = vadd.f32 %v262, %v320
        %v322 = vpop.f32.mrf.mxu0
        %323 = vmatprep.mubr.bf16.mxu0 0
        %324 = vmatmul.mubr.bf16.gmra.mxu0 %v281
        %v325 = vpop.f32.mrf.mxu0
        %v326 = vadd.f32 %v262, %v325
        %v327 = vpop.f32.mrf.mxu0
        %v328 = vpop.f32.mrf.mxu0
        %v329 = vadd.f32 %v262, %v328
        %v330 = vpop.f32.mrf.mxu0
        %331 = vdwg.mxu0
        %v332 = vmul.f32 %v318, %v318
        %v333 = vmul.f32 %v321, %v321
        %v334 = vmul.f32 %v326, %v326
        %v335 = vmul.f32 %v329, %v329
        %v336 = vmul.f32 %v318, %v332
        %v337 = vmul.f32 %v321, %v333
        %v338 = vmul.f32 %v326, %v334
        %v339 = vmul.f32 %v329, %v335
        %v340 = vmul.f32 %v336, 0.044715
        %v341 = vmul.f32 %v337, 0.044715
        %v342 = vmul.f32 %v338, 0.044715
        %v343 = vmul.f32 %v339, 0.044715
        %v344 = vadd.f32 %v318, %v340
        %v345 = vadd.f32 %v321, %v341
        %v346 = vadd.f32 %v326, %v342
        %v347 = vadd.f32 %v329, %v343
        %v348 = vmul.f32 %v344, 0.7978846
        %v349 = vmul.f32 %v345, 0.7978846
        %v350 = vmul.f32 %v346, 0.7978846
        %v351 = vmul.f32 %v347, 0.7978846
        %v352 = vtanh.pop %v348
        %v353 = vtanh.pop %v349
        %v354 = vtanh.pop %v350
        %v355 = vtanh.pop %v351
        %v356 = vadd.f32 %v352, 1.0
        %v357 = vadd.f32 %v353, 1.0
        %v358 = vadd.f32 %v354, 1.0
        %v359 = vadd.f32 %v355, 1.0
        %v360 = vmul.f32 %v356, 0.5
        %v361 = vmul.f32 %v357, 0.5
        %v362 = vmul.f32 %v358, 0.5
        %v363 = vmul.f32 %v359, 0.5
        %v364 = vmul.f32 %v318, %v360
        %v365 = vmul.f32 %v321, %v361
        %v366 = vmul.f32 %v326, %v362
        %v367 = vmul.f32 %v329, %v363
        %v368 = vpack.c.bf16 %v365, %v364
        %v369 = vpack.c.bf16 %v367, %v366
        %v370 = vld [vmem:[%s3] sm:$0xf]
        %v371 = vld [vmem:[%s3 + $0x4] sm:$0xf]
        %v372 = vld [vmem:[%s3 + $0x8] sm:$0xf]
        %v373 = vld [vmem:[%s3 + $0xc] sm:$0xf]
        %v374 = vld [vmem:[%s3 + $0x10] sm:$0xf]
        %v375 = vld [vmem:[%s3 + $0x14] sm:$0xf]
        %v376 = vld [vmem:[%s3 + $0x18] sm:$0xf]
        %v377 = vld [vmem:[%s3 + $0x1c] sm:$0xf]
        %v378 = vld [vmem:[%s4] sm:$0x1]
        %v380 = vlaneseq
        %v381 = vshrl.u32 %v380, 7
        %v382 = vsub.s32 0, %v381
        %v383 = vrot.slane %v378, %v382
        %v393 = vunpack.c.l.b16 %v370
        %v394 = vunpack.c.l.b16 %v371
        %v395 = vunpack.c.l.b16 %v372
        %v396 = vunpack.c.l.b16 %v373
        %v397 = vunpack.c.l.b16 %v374
        %v398 = vunpack.c.l.b16 %v375
        %v399 = vunpack.c.l.b16 %v376
        %v400 = vunpack.c.l.b16 %v377
        %v401 = vpack.c.b16 %v394, %v393
        %v402 = vpack.c.b16 %v396, %v395
        %v403 = vpack.c.b16 %v398, %v397
        %v404 = vpack.c.b16 %v400, %v399
        %vm409 = vcmask 523264
        %v411 = vsel %vm409, %v368, 0
        %v414 = vsel %vm409, %v369, 0
        %416 = vmatprep.subr.bf16.mxu0 0
        %417 = vmatpush1.bf16.msra.mxu0 0
        %418 = vmatprep.subr.bf16.mxu0 0
        %419 = vmatpush1.bf16.msra.mxu0 0
        %420 = vmatprep.subr.bf16.mxu0 0
        %421 = vmatpush1.bf16.msra.mxu0 0
        %422 = vmatprep.subr.bf16.mxu0 0
        %423 = vmatpush1.bf16.msra.mxu0 0
        %424 = vmatprep.subr.bf16.mxu0 0
        %425 = vmatpush1.bf16.msra.mxu0 %v404
        %426 = vmatprep.subr.bf16.mxu0 0
        %427 = vmatpush1.bf16.msra.mxu0 %v403
        %428 = vmatprep.subr.bf16.mxu0 0
        %429 = vmatpush1.bf16.msra.mxu0 %v402
        %430 = vmatprep.subr.bf16.mxu0 0
        %431 = vmatpush1.bf16.msra.mxu0 %v401
        %432 = vmatprep.subr.bf16.mxu0 0
        %433 = vmatpush2.bf16.msra.mxu0 0
        %434 = vmatprep.subr.bf16.mxu0 0
        %435 = vmatpush2.bf16.msra.mxu0 0
        %436 = vmatprep.subr.bf16.mxu0 0
        %437 = vmatpush2.bf16.msra.mxu0 0
        %438 = vmatprep.subr.bf16.mxu0 0
        %439 = vmatpush2.bf16.msra.mxu0 0
        %440 = vmatprep.subr.bf16.mxu0 0
        %441 = vmatpush2.bf16.msra.mxu0 0
        %442 = vmatprep.subr.bf16.mxu0 0
        %443 = vmatpush2.bf16.msra.mxu0 0
        %444 = vmatprep.subr.bf16.mxu0 0
        %445 = vmatpush2.bf16.msra.mxu0 0
        %446 = vmatprep.subr.bf16.mxu0 0
        %447 = vmatpush2.bf16.msra.mxu0 0
        %448 = vmatprep.mubr.bf16.mxu0 0
        %449 = vmatmul.mubr.bf16.gmra.mxu0 %v411
        %v450 = vpop.f32.mrf.mxu0
        %v451 = vadd.f32 %v383, %v450
        %v452 = vpop.f32.mrf.mxu0
        %v453 = vpop.f32.mrf.mxu0
        %v454 = vadd.f32 %v383, %v453
        %v455 = vpop.f32.mrf.mxu0
        %456 = vmatprep.mubr.bf16.mxu0 0
        %457 = vmatmul.mubr.bf16.gmra.mxu0 %v414
        %v458 = vpop.f32.mrf.mxu0
        %v459 = vadd.f32 %v383, %v458
        %v460 = vpop.f32.mrf.mxu0
        %v461 = vpop.f32.mrf.mxu0
        %v462 = vadd.f32 %v383, %v461
        %v463 = vpop.f32.mrf.mxu0
        %464 = vdwg.mxu0
        %v465 = vmul.f32 %v451, %v451
        %v466 = vmul.f32 %v454, %v454
        %v467 = vmul.f32 %v459, %v459
        %v468 = vmul.f32 %v462, %v462
        %v469 = vsel %vm276, %v465, 0.0
        %470 = vadd.xlane.f32.xlu0 %v469
        %v471 = vpop.xlane.xlu0 %470
        %v472 = vsel %vm276, %v466, 0.0
        %473 = vadd.xlane.f32.xlu0 %v472
        %v474 = vpop.xlane.xlu0 %473
        %v475 = vsel %vm276, %v467, 0.0
        %476 = vadd.xlane.f32.xlu0 %v475
        %v477 = vpop.xlane.xlu0 %476
        %v478 = vsel %vm276, %v468, 0.0
        %479 = vadd.xlane.f32.xlu0 %v478
        %v480 = vpop.xlane.xlu0 %479
        %v481 = vadd.f32 %v471, 1e-12
        %v482 = vadd.f32 %v474, 1e-12
        %v483 = vadd.f32 %v477, 1e-12
        %v484 = vadd.f32 %v480, 1e-12
        %v485 = vrsqrt.pop %v481
        %v486 = vrsqrt.pop %v482
        %v487 = vrsqrt.pop %v483
        %v488 = vrsqrt.pop %v484
        %v489 = vmul.f32 %v451, %v485
        %v490 = vmul.f32 %v454, %v486
        %v491 = vmul.f32 %v459, %v487
        %v492 = vmul.f32 %v462, %v488
        %493 = vst.msk [vmem:[%s226] sm:$0xff] %vm276, %v489
        %494 = vst.msk [vmem:[%s226 + $0x8] sm:$0xff] %vm276, %v490
        %495 = vst.msk [vmem:[%s226 + $0x10] sm:$0xff] %vm276, %v491
        %496 = vst.msk [vmem:[%s226 + $0x18] sm:$0xff] %vm276, %v492
        %s497 = sand.u32 %s134, 1
        %s498 = sand.u32 %s134, 1
        %s499 = smul.addr %s498, 32
        %s500 = scalar_lea.vmem [#allocation2], %s499
        // Predicated region
        $region41: #{_forward.1} parent=39 // pred_check
          %p501 = pneg %p144
        $region42: #{_forward.1} parent=39 // pred_check_branch
          %503 = sbr.rel (%p501) target = $region44
        $region43: #{_forward.1} parent=39 // pred_region
          %s504 = smul.u32 4, %s16
          %s505 = ssub.s32 5, %s504
          %p506 = scmp.lt.s32.totalorder %s505, 4
          %s507 = scalar_select %p506, %s505, 4
          %s508 = smul.u32 128, %s507
          %p509 = scmp.ne.s32.totalorder 0, %s508
          %s510 = smul.addr %s504, 8
          %s511 = scalar_lea.vmem %s5, %s510
          // Predicated region
          $region45: #{_forward.1} parent=43 // pred_check
            %p512 = pneg %p509
          $region46: #{_forward.1} parent=43 // pred_check_branch
            %514 = sbr.rel (%p512) target = $region48
          $region47: #{_forward.1} parent=43 // pred_region
            // Predicated region
            $region49: #{_forward.1} parent=47 // pred_check
              _
            $region50: #{_forward.1} parent=47 // pred_check_branch
              %516 = sbr.rel (0) target = $region52
            $region51: #{_forward.1} parent=47 // pred_region
              // Predicated region
              $region71: #{_forward.1} parent=51 // pred_check
                _
              $region72: #{_forward.1} parent=51 // pred_check_branch
                %572 = sbr.rel (0) target = $region74
              $region73: #{_forward.1} parent=51 // pred_region
                %s573 = sshrl.u32 %s507, 2
                // While loop
                $region75: #{_forward.1} parent=73 // loop_pre_header
                  _
                $region76: #{_forward.1} parent=73 // loop_header
                  %s575 = sphi 0, %s577
                  %p576 = scmp.ge.s32.totalorder %s575, %s573
                  %s580 = sphi 0, %s593
                  %s581 = sphi %s500, %s596
                  %s582 = sphi %s511, %s597
                $region77: #{_forward.1} parent=73 // loop_header_branch
                  %579 = sbr.rel (%p576) target = $region81
                $region78: #{_forward.1} parent=73 // loop_body
                  %v583 = vld [vmem:[%s581] sm:$0xff]
                  %584 = vst [vmem:[%s582] sm:$0xff] %v583
                  %v585 = vld [vmem:[%s581 + $0x8] sm:$0xff]
                  %586 = vst [vmem:[%s582 + $0x8] sm:$0xff] %v585
                  %v587 = vld [vmem:[%s581 + $0x10] sm:$0xff]
                  %588 = vst [vmem:[%s582 + $0x10] sm:$0xff] %v587
                  %v589 = vld [vmem:[%s581 + $0x18] sm:$0xff]
                  %590 = vst [vmem:[%s582 + $0x18] sm:$0xff] %v589
                  %s591 = sadd.s32 1, %s580
                  %p592 = scmp.ge.s32.totalorder %s591, %s573
                  %s593 = scalar_select %p592, 0, %s591
                  %s594 = smul.u32 %s593, 32
                  %s595 = smul.u32 %s593, 32
                  %s596 = scalar_lea.vmem %s500, %s594 [#allocation2]
                  %s597 = scalar_lea.vmem %s511, %s595
                $region79: #{_forward.1} parent=73 // loop_footer
                  %s577 = sadd.s32 %s575, 1
                $region80: #{_forward.1} parent=73 // loop_footer_branch
                  %574 = sbr.rel target = $region76
                $region81: #{_forward.1} parent=73 // loop_exit
                  _
                %s598 = sshrl.u32 %s507, 2
                %s599 = sand.u32 %s507, 3
                %s600 = smul.u32 %s598, 4
                %s601 = smul.u32 8, %s600
                %s602 = scalar_lea.vmem %s500, %s601 [#allocation2]
                %s603 = smul.u32 8, %s600
                %s604 = scalar_lea.vmem %s511, %s603
                // While loop
                $region82: #{_forward.1} parent=73 // loop_pre_header
                  _
                $region83: #{_forward.1} parent=73 // loop_header
                  %s606 = sphi 0, %s608
                  %p607 = scmp.ge.s32.totalorder %s606, %s599
                  %s611 = sphi 0, %s618
                  %s612 = sphi %s602, %s621
                  %s613 = sphi %s604, %s622
                $region84: #{_forward.1} parent=73 // loop_header_branch
                  %610 = sbr.rel (%p607) target = $region88
                $region85: #{_forward.1} parent=73 // loop_body
                  %v614 = vld [vmem:[%s612] sm:$0xff]
                  %615 = vst [vmem:[%s613] sm:$0xff] %v614
                  %s616 = sadd.s32 1, %s611
                  %p617 = scmp.ge.s32.totalorder %s616, %s599
                  %s618 = scalar_select %p617, 0, %s616
                  %s619 = smul.u32 %s618, 8
                  %s620 = smul.u32 %s618, 8
                  %s621 = scalar_lea.vmem %s602, %s619 [#allocation2]
                  %s622 = scalar_lea.vmem %s604, %s620
                $region86: #{_forward.1} parent=73 // loop_footer
                  %s608 = sadd.s32 %s606, 1
                $region87: #{_forward.1} parent=73 // loop_footer_branch
                  %605 = sbr.rel target = $region83
                $region88: #{_forward.1} parent=73 // loop_exit
                  _
              $region74: #{_forward.1} parent=51 // pred_fallthru
                _
              // Predicated region
              $region89: #{_forward.1} parent=51 // pred_check
                _
              $region90: #{_forward.1} parent=51 // pred_check_branch
                %624 = sbr.rel target = $region92
              $region91: #{_forward.1} parent=51 // pred_region
                _
              $region92: #{_forward.1} parent=51 // pred_fallthru
                _
            $region52: #{_forward.1} parent=47 // pred_fallthru
              _
            // Predicated region
            $region53: #{_forward.1} parent=47 // pred_check
              _
            $region54: #{_forward.1} parent=47 // pred_check_branch
              %518 = sbr.rel target = $region56
            $region55: #{_forward.1} parent=47 // pred_region
              %s520 = ssub.s32 256, 1
              %s521 = sshrl.u32 %s507, 2
              // While loop
              $region57: #{_forward.1} parent=55 // loop_pre_header
                _
              $region58: #{_forward.1} parent=55 // loop_header
                %s523 = sphi 0, %s525
                %p524 = scmp.ge.s32.totalorder %s523, %s521
                %s528 = sphi 0, %s541
                %s529 = sphi %s500, %s544
                %s530 = sphi %s511, %s545
              $region59: #{_forward.1} parent=55 // loop_header_branch
                %527 = sbr.rel (%p524) target = $region63
              $region60: #{_forward.1} parent=55 // loop_body
                %v531 = vld [vmem:[%s529] sm:%s520]
                %532 = vst [vmem:[%s530] sm:%s520] %v531
                %v533 = vld [vmem:[%s529 + $0x8] sm:%s520]
                %534 = vst [vmem:[%s530 + $0x8] sm:%s520] %v533
                %v535 = vld [vmem:[%s529 + $0x10] sm:%s520]
                %536 = vst [vmem:[%s530 + $0x10] sm:%s520] %v535
                %v537 = vld [vmem:[%s529 + $0x18] sm:%s520]
                %538 = vst [vmem:[%s530 + $0x18] sm:%s520] %v537
                %s539 = sadd.s32 1, %s528
                %p540 = scmp.ge.s32.totalorder %s539, %s521
                %s541 = scalar_select %p540, 0, %s539
                %s542 = smul.u32 %s541, 32
                %s543 = smul.u32 %s541, 32
                %s544 = scalar_lea.vmem %s500, %s542 [#allocation2]
                %s545 = scalar_lea.vmem %s511, %s543
              $region61: #{_forward.1} parent=55 // loop_footer
                %s525 = sadd.s32 %s523, 1
              $region62: #{_forward.1} parent=55 // loop_footer_branch
                %522 = sbr.rel target = $region58
              $region63: #{_forward.1} parent=55 // loop_exit
                _
              %s546 = sshrl.u32 %s507, 2
              %s547 = sand.u32 %s507, 3
              %s548 = smul.u32 %s546, 4
              %s549 = smul.u32 8, %s548
              %s550 = scalar_lea.vmem %s500, %s549 [#allocation2]
              %s551 = smul.u32 8, %s548
              %s552 = scalar_lea.vmem %s511, %s551
              // While loop
              $region64: #{_forward.1} parent=55 // loop_pre_header
                _
              $region65: #{_forward.1} parent=55 // loop_header
                %s554 = sphi 0, %s556
                %p555 = scmp.ge.s32.totalorder %s554, %s547
                %s559 = sphi 0, %s566
                %s560 = sphi %s550, %s569
                %s561 = sphi %s552, %s570
              $region66: #{_forward.1} parent=55 // loop_header_branch
                %558 = sbr.rel (%p555) target = $region70
              $region67: #{_forward.1} parent=55 // loop_body
                %v562 = vld [vmem:[%s560] sm:%s520]
                %563 = vst [vmem:[%s561] sm:%s520] %v562
                %s564 = sadd.s32 1, %s559
                %p565 = scmp.ge.s32.totalorder %s564, %s547
                %s566 = scalar_select %p565, 0, %s564
                %s567 = smul.u32 %s566, 8
                %s568 = smul.u32 %s566, 8
                %s569 = scalar_lea.vmem %s550, %s567 [#allocation2]
                %s570 = scalar_lea.vmem %s552, %s568
              $region68: #{_forward.1} parent=55 // loop_footer
                %s556 = sadd.s32 %s554, 1
              $region69: #{_forward.1} parent=55 // loop_footer_branch
                %553 = sbr.rel target = $region65
              $region70: #{_forward.1} parent=55 // loop_exit
                _
            $region56: #{_forward.1} parent=47 // pred_fallthru
              _
          $region48: #{_forward.1} parent=43 // pred_fallthru
            _
          %625 = vnop
        $region44: #{_forward.1} parent=39 // pred_fallthru
          _
      $region40: #{_forward.1} parent=5 // pred_fallthru
        _
      %p626 = scmp.le.s32.totalorder 2, %s11
      // Predicated region
      $region93: #{_forward.1} parent=5 // pred_check
        %p627 = pneg %p626
      $region94: #{_forward.1} parent=5 // pred_check_branch
        %629 = sbr.rel (%p627) target = $region96
      $region95: #{_forward.1} parent=5 // pred_region
        %s630 = ssub.s32 %s11, 2
        // Predicated region
        $region97: #{_forward.1} parent=95 // pred_check
          %p631 = pneg %p150
        $region98: #{_forward.1} parent=95 // pred_check_branch
          %633 = sbr.rel (%p631) target = $region100
        $region99: #{_forward.1} parent=95 // pred_region
          %s634 = sand.u32 %s135, 1
          %s635 = sand.u32 %s135, 1
          %s636 = smul.addr %s635, 32
          %s637 = scalar_lea.vmem [#allocation2], %s636
        $region100: #{_forward.1} parent=95 // pred_fallthru
          _
      $region96: #{_forward.1} parent=5 // pred_fallthru
        _
    $region6: #{_forward.1} parent=1 // loop_footer
      %s15 = sadd.s32 1, %s11
    $region7: #{_forward.1} parent=1 // loop_footer_branch
      %10 = sbr.rel target = $region3
    $region8: #{_forward.1} parent=1 // loop_exit
      _

</llo_original>
